<compile_context>
chip_gen: v6e
topology: v6e:2x2x1
jax: 0.10.0
libtpu: 0.0.40
codegen_flags: <defaults>
</compile_context>

<pallas_src>
import jax
import jax.numpy as jnp
from jax.experimental import pallas as pl
from jax.experimental.pallas import tpu as pltpu


def siamese_fcn_kernel(a_ref, b_ref,
                       w1_ref, b1_ref,
                       w2_ref, b2_ref,
                       w3_ref, b3_ref,
                       wc_ref, bc_ref,
                       out_ref):
    tb = a_ref.shape[0]            # batch tile (rows of a / of b)
    so = w3_ref.shape[1]           # shared_out_feature

    bf16 = jnp.bfloat16

    # ---- Fused encoder: one matmul chain over the stacked (2*tb, in) batch.
    x = jnp.concatenate([a_ref[...], b_ref[...]], axis=0)            # f32
    h = jnp.dot(x.astype(bf16), w1_ref[...],
                preferred_element_type=jnp.float32) + b1_ref[...]
    h = jnp.maximum(h, 0.0)
    h = jnp.dot(h.astype(bf16), w2_ref[...],
                preferred_element_type=jnp.float32) + b2_ref[...]
    h = jnp.maximum(h, 0.0)
    h = jnp.dot(h.astype(bf16), w3_ref[...],
                preferred_element_type=jnp.float32) + b3_ref[...]
    h = jnp.maximum(h, 0.0)

    rep_a = h[:tb]
    rep_b = h[tb:]
    diff = jnp.abs(rep_a - rep_b)

    # ---- Classifier over cat(a, b, |a-b|) as three matmuls on in-kernel
    #      slices of the single resident classifier weight.
    wca = wc_ref[0 * so:1 * so, :]
    wcb = wc_ref[1 * so:2 * so, :]
    wcd = wc_ref[2 * so:3 * so, :]

    scores = (jnp.dot(rep_a.astype(bf16), wca, preferred_element_type=jnp.float32)
              + jnp.dot(rep_b.astype(bf16), wcb, preferred_element_type=jnp.float32)
              + jnp.dot(diff.astype(bf16), wcd, preferred_element_type=jnp.float32)
              + bc_ref[...])
    out_ref[...] = scores.astype(out_ref.dtype)


def siamese_fcn_forward(rep_a, rep_b, params, *, block_batch=256):
    (w1, b1, w2, b2, w3, b3, wc, bc) = params
    batch, shared_in = rep_a.shape
    h1 = w1.shape[1]
    h2 = w2.shape[1]
    so = w3.shape[1]
    num_labels = wc.shape[1]

    # Weights in bf16 (halves weight HBM traffic, native-rate MXU); biases f32.
    w1b = w1.astype(jnp.bfloat16)
    w2b = w2.astype(jnp.bfloat16)
    w3b = w3.astype(jnp.bfloat16)
    wcb = wc.astype(jnp.bfloat16)

    # Lane-dense classifier output: pad label dim up to a multiple of 128.
    pad_n = ((num_labels + 127) // 128) * 128
    wc_p = jnp.zeros((3 * so, pad_n), jnp.bfloat16).at[:, :num_labels].set(wcb)
    bc_p = jnp.zeros((1, pad_n), jnp.float32).at[:, :num_labels].set(bc)

    # Batch tile: biggest candidate <= block_batch that divides batch and is a
    # multiple of 8; fall back to the whole batch (full-dim block is legal).
    tb = batch
    for cand in (block_batch, 512, 256, 128, 64, 32, 16, 8):
        if 0 < cand <= batch and batch % cand == 0 and cand % 8 == 0:
            tb = cand
            break
    grid = (batch // tb,)

    def const_spec(shape):
        return pl.BlockSpec(shape, lambda i: (0, 0))   # resident, DMA'd once

    out = pl.pallas_call(
        siamese_fcn_kernel,
        out_shape=jax.ShapeDtypeStruct((batch, pad_n), jnp.float32),
        grid=grid,
        in_specs=[
            pl.BlockSpec((tb, shared_in), lambda i: (i, 0)),   # rep_a tile
            pl.BlockSpec((tb, shared_in), lambda i: (i, 0)),   # rep_b tile
            const_spec((shared_in, h1)), const_spec((1, h1)),  # w1, b1
            const_spec((h1, h2)),        const_spec((1, h2)),  # w2, b2
            const_spec((h2, so)),        const_spec((1, so)),  # w3, b3
            const_spec((3 * so, pad_n)), const_spec((1, pad_n)),  # wc, bc
        ],
        out_specs=pl.BlockSpec((tb, pad_n), lambda i: (i, 0)),
        compiler_params=pltpu.CompilerParams(
            dimension_semantics=("parallel",)),
    )(rep_a, rep_b, w1b, b1, w2b, b2, w3b, b3, wc_p, bc_p)

    return out[:, :num_labels]


def init_params(key, shared_in=1024, shared_out=64, num_labels=2):
    """Deterministic synthetic parameters (shapes match SiameseFCN.__init__)."""
    ks = jax.random.split(key, 8)

    def lin(kw, fan_in, fan_out):
        scale = 1.0 / jnp.sqrt(fan_in)
        return jax.random.uniform(kw, (fan_in, fan_out), jnp.float32, -scale, scale)

    w1 = lin(ks[0], shared_in, 256)
    b1 = jax.random.uniform(ks[1], (1, 256), jnp.float32, -0.05, 0.05)
    w2 = lin(ks[2], 256, 64)
    b2 = jax.random.uniform(ks[3], (1, 64), jnp.float32, -0.05, 0.05)
    w3 = lin(ks[4], 64, shared_out)
    b3 = jax.random.uniform(ks[5], (1, shared_out), jnp.float32, -0.05, 0.05)
    wc = lin(ks[6], 3 * shared_out, num_labels)
    bc = jax.random.uniform(ks[7], (1, num_labels), jnp.float32, -0.05, 0.05)
    return (w1, b1, w2, b2, w3, b3, wc, bc)


def reference_forward_f32(rep_a, rep_b, params):
    """Pure-f32 reference (original module semantics)."""
    (w1, b1, w2, b2, w3, b3, wc, bc) = params

    def enc(x):
        h = jnp.maximum(x @ w1 + b1, 0.0)
        h = jnp.maximum(h @ w2 + b2, 0.0)
        h = jnp.maximum(h @ w3 + b3, 0.0)
        return h

    ra, rb = enc(rep_a), enc(rep_b)
    feat = jnp.concatenate([ra, rb, jnp.abs(ra - rb)], axis=1)
    return feat @ wc + bc


def reference_forward_bf16(rep_a, rep_b, params):
    """Reference matching the kernel's bf16-weight / f32-accumulate math."""
    (w1, b1, w2, b2, w3, b3, wc, bc) = params
    bf = jnp.bfloat16

    def lin(x, w, b):
        return jnp.dot(x.astype(bf), w.astype(bf),
                       preferred_element_type=jnp.float32) + b

    def enc(x):
        h = jnp.maximum(lin(x, w1, b1), 0.0)
        h = jnp.maximum(lin(h, w2, b2), 0.0)
        h = jnp.maximum(lin(h, w3, b3), 0.0)
        return h

    ra, rb = enc(rep_a), enc(rep_b)
    feat = jnp.concatenate([ra, rb, jnp.abs(ra - rb)], axis=1)
    return lin(feat, wc, bc)


if __name__ == "__main__":
    key = jax.random.PRNGKey(0)
    k_params, k_a, k_b = jax.random.split(key, 3)

    shared_in, shared_out, num_labels = 1024, 64, 2
    batch = 16

    params = init_params(k_params, shared_in, shared_out, num_labels)
    rep_a = jax.random.normal(k_a, (batch, shared_in), jnp.float32)
    rep_b = jax.random.normal(k_b, (batch, shared_in), jnp.float32)

    # block_batch=8 -> 2-step pipelined grid even at this tiny test batch.
    out = siamese_fcn_forward(rep_a, rep_b, params, block_batch=8)
    out = jax.block_until_ready(out)

    assert out.shape == (batch, num_labels)

    # Tight check against a bf16-weight-matched reference (same math path).
    ref_bf16 = reference_forward_bf16(rep_a, rep_b, params)
    assert jnp.allclose(out, ref_bf16, atol=2e-3, rtol=2e-3)

    # Loose semantic check against the pure-f32 PyTorch-equivalent forward
    # (bf16 weight cast is a deliberate precision trade-off).
    ref_f32 = reference_forward_f32(rep_a, rep_b, params)
    assert jnp.allclose(out, ref_f32, atol=5e-2, rtol=5e-2)

    print("KERNEL_OK")
</pallas_src>

<mosaic_0001>
module attributes {stable_mosaic.version = 11 : i64} {
  func.func @siamese_fcn_kernel(%arg0: i32, %arg1: memref<8x1024xf32, #tpu.memory_space<vmem>>, %arg2: memref<8x1024xf32, #tpu.memory_space<vmem>>, %arg3: memref<1024x256xbf16, #tpu.memory_space<vmem>>, %arg4: memref<1x256xf32, #tpu.memory_space<vmem>>, %arg5: memref<256x64xbf16, #tpu.memory_space<vmem>>, %arg6: memref<1x64xf32, #tpu.memory_space<vmem>>, %arg7: memref<64x64xbf16, #tpu.memory_space<vmem>>, %arg8: memref<1x64xf32, #tpu.memory_space<vmem>>, %arg9: memref<192x128xbf16, #tpu.memory_space<vmem>>, %arg10: memref<1x128xf32, #tpu.memory_space<vmem>>, %arg11: memref<8x128xf32, #tpu.memory_space<vmem>>) attributes {dimension_semantics = [#tpu.dimension_semantics<parallel>], iteration_bounds = array<i64: 2>, scalar_prefetch = 0 : i64, scratch_operands = 0 : i64, tpu.core_type = #tpu.core_type<tc>, window_params = [{transform_indices = @transform_0, window_bounds = array<i64: 8, 1024>}, {transform_indices = @transform_1, window_bounds = array<i64: 8, 1024>}, {pipeline_mode = #tpu.pipeline_mode<synchronous>, transform_indices = @transform_2, window_bounds = array<i64: 1024, 256>}, {pipeline_mode = #tpu.pipeline_mode<synchronous>, transform_indices = @transform_3, window_bounds = array<i64: 1, 256>}, {pipeline_mode = #tpu.pipeline_mode<synchronous>, transform_indices = @transform_4, window_bounds = array<i64: 256, 64>}, {pipeline_mode = #tpu.pipeline_mode<synchronous>, transform_indices = @transform_5, window_bounds = array<i64: 1, 64>}, {pipeline_mode = #tpu.pipeline_mode<synchronous>, transform_indices = @transform_6, window_bounds = array<i64: 64, 64>}, {pipeline_mode = #tpu.pipeline_mode<synchronous>, transform_indices = @transform_7, window_bounds = array<i64: 1, 64>}, {pipeline_mode = #tpu.pipeline_mode<synchronous>, transform_indices = @transform_8, window_bounds = array<i64: 192, 128>}, {pipeline_mode = #tpu.pipeline_mode<synchronous>, transform_indices = @transform_9, window_bounds = array<i64: 1, 128>}, {transform_indices = @transform_10, window_bounds = array<i64: 8, 128>}]} {
    %c0 = arith.constant 0 : index
    %c0_0 = arith.constant 0 : index
    %0 = vector.load %arg1[%c0, %c0_0] : memref<8x1024xf32, #tpu.memory_space<vmem>>, vector<8x1024xf32>
    %c0_1 = arith.constant 0 : index
    %c0_2 = arith.constant 0 : index
    %1 = vector.load %arg2[%c0_1, %c0_2] : memref<8x1024xf32, #tpu.memory_space<vmem>>, vector<8x1024xf32>
    %2 = tpu.concatenate %0, %1 in 0 : vector<8x1024xf32>, vector<8x1024xf32> -> vector<16x1024xf32>
    %3 = arith.truncf %2 : vector<16x1024xf32> to vector<16x1024xbf16>
    %c0_3 = arith.constant 0 : index
    %c0_4 = arith.constant 0 : index
    %4 = vector.load %arg3[%c0_3, %c0_4] : memref<1024x256xbf16, #tpu.memory_space<vmem>>, vector<1024x256xbf16>
    %cst = arith.constant dense<0.000000e+00> : vector<16x256xf32>
    %5 = tpu.matmul %3, %4, %cst {dimension_numbers = #tpu.dot_dimension_numbers<[1], [0], [0], [1], [0, 0, 1, 1], [], []>} : vector<16x1024xbf16>, vector<1024x256xbf16>, vector<16x256xf32> -> vector<16x256xf32>
    %c0_5 = arith.constant 0 : index
    %c0_6 = arith.constant 0 : index
    %6 = vector.load %arg4[%c0_5, %c0_6] : memref<1x256xf32, #tpu.memory_space<vmem>>, vector<1x256xf32>
    %7 = vector.broadcast %6 : vector<1x256xf32> to vector<16x256xf32>
    %8 = arith.addf %5, %7 : vector<16x256xf32>
    %cst_7 = arith.constant 0.000000e+00 : f32
    %9 = vector.broadcast %cst_7 : f32 to vector<16x256xf32>
    %10 = arith.maximumf %8, %9 : vector<16x256xf32>
    %11 = arith.truncf %10 : vector<16x256xf32> to vector<16x256xbf16>
    %c0_8 = arith.constant 0 : index
    %c0_9 = arith.constant 0 : index
    %12 = vector.load %arg5[%c0_8, %c0_9] : memref<256x64xbf16, #tpu.memory_space<vmem>>, vector<256x64xbf16>
    %cst_10 = arith.constant dense<0.000000e+00> : vector<16x64xf32>
    %13 = tpu.matmul %11, %12, %cst_10 {dimension_numbers = #tpu.dot_dimension_numbers<[1], [0], [0], [1], [0, 0, 1, 1], [], []>} : vector<16x256xbf16>, vector<256x64xbf16>, vector<16x64xf32> -> vector<16x64xf32>
    %c0_11 = arith.constant 0 : index
    %c0_12 = arith.constant 0 : index
    %14 = vector.load %arg6[%c0_11, %c0_12] : memref<1x64xf32, #tpu.memory_space<vmem>>, vector<1x64xf32>
    %15 = vector.broadcast %14 : vector<1x64xf32> to vector<16x64xf32>
    %16 = arith.addf %13, %15 : vector<16x64xf32>
    %cst_13 = arith.constant 0.000000e+00 : f32
    %17 = vector.broadcast %cst_13 : f32 to vector<16x64xf32>
    %18 = arith.maximumf %16, %17 : vector<16x64xf32>
    %19 = arith.truncf %18 : vector<16x64xf32> to vector<16x64xbf16>
    %c0_14 = arith.constant 0 : index
    %c0_15 = arith.constant 0 : index
    %20 = vector.load %arg7[%c0_14, %c0_15] : memref<64x64xbf16, #tpu.memory_space<vmem>>, vector<64x64xbf16>
    %cst_16 = arith.constant dense<0.000000e+00> : vector<16x64xf32>
    %21 = tpu.matmul %19, %20, %cst_16 {dimension_numbers = #tpu.dot_dimension_numbers<[1], [0], [0], [1], [0, 0, 1, 1], [], []>} : vector<16x64xbf16>, vector<64x64xbf16>, vector<16x64xf32> -> vector<16x64xf32>
    %c0_17 = arith.constant 0 : index
    %c0_18 = arith.constant 0 : index
    %22 = vector.load %arg8[%c0_17, %c0_18] : memref<1x64xf32, #tpu.memory_space<vmem>>, vector<1x64xf32>
    %23 = vector.broadcast %22 : vector<1x64xf32> to vector<16x64xf32>
    %24 = arith.addf %21, %23 : vector<16x64xf32>
    %cst_19 = arith.constant 0.000000e+00 : f32
    %25 = vector.broadcast %cst_19 : f32 to vector<16x64xf32>
    %26 = arith.maximumf %24, %25 : vector<16x64xf32>
    %27 = vector.extract_strided_slice %26 {offsets = [0, 0], sizes = [8, 64], strides = [1, 1]} : vector<16x64xf32> to vector<8x64xf32>
    %28 = vector.extract_strided_slice %26 {offsets = [8, 0], sizes = [8, 64], strides = [1, 1]} : vector<16x64xf32> to vector<8x64xf32>
    %29 = arith.subf %27, %28 : vector<8x64xf32>
    %30 = math.absf %29 : vector<8x64xf32>
    %c0_20 = arith.constant 0 : index
    %c0_21 = arith.constant 0 : index
    %31 = vector.load %arg9[%c0_20, %c0_21] : memref<192x128xbf16, #tpu.memory_space<vmem>>, vector<64x128xbf16>
    %c64 = arith.constant 64 : index
    %c0_22 = arith.constant 0 : index
    %32 = vector.load %arg9[%c64, %c0_22] : memref<192x128xbf16, #tpu.memory_space<vmem>>, vector<64x128xbf16>
    %c128 = arith.constant 128 : index
    %c0_23 = arith.constant 0 : index
    %33 = vector.load %arg9[%c128, %c0_23] : memref<192x128xbf16, #tpu.memory_space<vmem>>, vector<64x128xbf16>
    %34 = arith.truncf %27 : vector<8x64xf32> to vector<8x64xbf16>
    %cst_24 = arith.constant dense<0.000000e+00> : vector<8x128xf32>
    %35 = tpu.matmul %34, %31, %cst_24 {dimension_numbers = #tpu.dot_dimension_numbers<[1], [0], [0], [1], [0, 0, 1, 1], [], []>} : vector<8x64xbf16>, vector<64x128xbf16>, vector<8x128xf32> -> vector<8x128xf32>
    %36 = arith.truncf %28 : vector<8x64xf32> to vector<8x64xbf16>
    %cst_25 = arith.constant dense<0.000000e+00> : vector<8x128xf32>
    %37 = tpu.matmul %36, %32, %cst_25 {dimension_numbers = #tpu.dot_dimension_numbers<[1], [0], [0], [1], [0, 0, 1, 1], [], []>} : vector<8x64xbf16>, vector<64x128xbf16>, vector<8x128xf32> -> vector<8x128xf32>
    %38 = arith.addf %35, %37 : vector<8x128xf32>
    %39 = arith.truncf %30 : vector<8x64xf32> to vector<8x64xbf16>
    %cst_26 = arith.constant dense<0.000000e+00> : vector<8x128xf32>
    %40 = tpu.matmul %39, %33, %cst_26 {dimension_numbers = #tpu.dot_dimension_numbers<[1], [0], [0], [1], [0, 0, 1, 1], [], []>} : vector<8x64xbf16>, vector<64x128xbf16>, vector<8x128xf32> -> vector<8x128xf32>
    %41 = arith.addf %38, %40 : vector<8x128xf32>
    %c0_27 = arith.constant 0 : index
    %c0_28 = arith.constant 0 : index
    %42 = vector.load %arg10[%c0_27, %c0_28] : memref<1x128xf32, #tpu.memory_space<vmem>>, vector<1x128xf32>
    %43 = vector.broadcast %42 : vector<1x128xf32> to vector<8x128xf32>
    %44 = arith.addf %41, %43 : vector<8x128xf32>
    %c0_29 = arith.constant 0 : index
    %c0_30 = arith.constant 0 : index
    %45 = vector.load %arg11[%c0_29, %c0_30] : memref<8x128xf32, #tpu.memory_space<vmem>>, vector<8x128xf32>
    tpu.vector_store %arg11[%c0_29, %c0_30], %44 {strides = array<i32>} : memref<8x128xf32, #tpu.memory_space<vmem>>, vector<8x128xf32>,
    return
  }
  func.func @transform_0(%arg0: i32) -> (i32, i32) {
    %c0_i32 = arith.constant 0 : i32
    %c0_i32_0 = arith.constant 0 : i32
    return %arg0, %c0_i32 : i32, i32
  }
  func.func @transform_1(%arg0: i32) -> (i32, i32) {
    %c0_i32 = arith.constant 0 : i32
    %c0_i32_0 = arith.constant 0 : i32
    return %arg0, %c0_i32 : i32, i32
  }
  func.func @transform_2(%arg0: i32) -> (i32, i32) {
    %c0_i32 = arith.constant 0 : i32
    %c0_i32_0 = arith.constant 0 : i32
    %c0_i32_1 = arith.constant 0 : i32
    return %c0_i32, %c0_i32_0 : i32, i32
  }
  func.func @transform_3(%arg0: i32) -> (i32, i32) {
    %c0_i32 = arith.constant 0 : i32
    %c0_i32_0 = arith.constant 0 : i32
    %c0_i32_1 = arith.constant 0 : i32
    return %c0_i32, %c0_i32_0 : i32, i32
  }
  func.func @transform_4(%arg0: i32) -> (i32, i32) {
    %c0_i32 = arith.constant 0 : i32
    %c0_i32_0 = arith.constant 0 : i32
    %c0_i32_1 = arith.constant 0 : i32
    return %c0_i32, %c0_i32_0 : i32, i32
  }
  func.func @transform_5(%arg0: i32) -> (i32, i32) {
    %c0_i32 = arith.constant 0 : i32
    %c0_i32_0 = arith.constant 0 : i32
    %c0_i32_1 = arith.constant 0 : i32
    return %c0_i32, %c0_i32_0 : i32, i32
  }
  func.func @transform_6(%arg0: i32) -> (i32, i32) {
    %c0_i32 = arith.constant 0 : i32
    %c0_i32_0 = arith.constant 0 : i32
    %c0_i32_1 = arith.constant 0 : i32
    return %c0_i32, %c0_i32_0 : i32, i32
  }
  func.func @transform_7(%arg0: i32) -> (i32, i32) {
    %c0_i32 = arith.constant 0 : i32
    %c0_i32_0 = arith.constant 0 : i32
    %c0_i32_1 = arith.constant 0 : i32
    return %c0_i32, %c0_i32_0 : i32, i32
  }
  func.func @transform_8(%arg0: i32) -> (i32, i32) {
    %c0_i32 = arith.constant 0 : i32
    %c0_i32_0 = arith.constant 0 : i32
    %c0_i32_1 = arith.constant 0 : i32
    return %c0_i32, %c0_i32_0 : i32, i32
  }
  func.func @transform_9(%arg0: i32) -> (i32, i32) {
    %c0_i32 = arith.constant 0 : i32
    %c0_i32_0 = arith.constant 0 : i32
    %c0_i32_1 = arith.constant 0 : i32
    return %c0_i32, %c0_i32_0 : i32, i32
  }
  func.func @transform_10(%arg0: i32) -> (i32, i32) {
    %c0_i32 = arith.constant 0 : i32
    %c0_i32_0 = arith.constant 0 : i32
    return %arg0, %c0_i32 : i32, i32
  }
}

</mosaic_0001>

<llo_original>
// kernel: tpu_custom_call.1
$region0: #{tpu_custom_call.1}
  #allocation0 [shape = 'u32[]', space=smem, size = 0x4, offset = 0x4, fixed_abs, tag = 'smem constant byte address 0x4 - core index']
  #allocation1 [shape = 'u32[144,128]{1,0:T(1,128)}', space=vmem, size = 0x12000, scoped, tag = 'internal scratch']
  %s0 = inlined_call_operand.vmem [shape: f32[16,1024], index: 0, kind: input, shape index: {}]
  %s1 = inlined_call_operand.hbm [shape: f32[16,1024], index: 1, kind: input, shape index: {}]
  %s2 = inlined_call_operand.hbm [shape: bf16[1024,256], index: 2, kind: input, shape index: {}]
  %s3 = inlined_call_operand.vmem [shape: f32[1,256], index: 3, kind: input, shape index: {}]
  %s4 = inlined_call_operand.vmem [shape: bf16[256,64], index: 4, kind: input, shape index: {}]
  %s5 = inlined_call_operand.vmem [shape: f32[1,64], index: 5, kind: input, shape index: {}]
  %s6 = inlined_call_operand.vmem [shape: bf16[64,64], index: 6, kind: input, shape index: {}]
  %s7 = inlined_call_operand.vmem [shape: f32[1,64], index: 7, kind: input, shape index: {}]
  %s8 = inlined_call_operand.hbm [shape: bf16[192,128], index: 8, kind: input, shape index: {}]
  %s9 = inlined_call_operand.vmem [shape: f32[1,128], index: 9, kind: input, shape index: {}]
  %s10 = inlined_call_operand.hbm [shape: f32[16,128], index: 10, kind: output, shape index: {}]
  %s11 = sld [smem:[#allocation0]]
  $region85: #{tpu_custom_call.1} parent=0
    _
  %s13 = ssub.s32 1, %s11
  %s14 = scalar_select 0, %s13, %s11
  $region1: #{tpu_custom_call.1} parent=0
    #allocation2 [shape = 'u8[65536]{0}', space=vmem, size = 0x10000, scoped, tag = 'input window, operand 1']
    #allocation3 [shape = 's32[2]{0}', space=sflag, size = 0x8, scoped, tag = 'scoped memory for tpu_custom_call.1']
    #allocation4 [shape = 's32[2]{0}', space=sflag, size = 0x8, scoped, tag = 'scoped memory for tpu_custom_call.1']
    #allocation5 [shape = 'u8[524288]{0}', space=vmem, size = 0x80000, scoped, tag = 'input window, operand 2, single buffered']
    #allocation6 [shape = 's32[1]{0}', space=sflag, size = 0x4, scoped, tag = 'scoped memory for tpu_custom_call.1']
    #allocation7 [shape = 'u8[49152]{0}', space=vmem, size = 0xc000, scoped, tag = 'input window, operand 8, single buffered']
    #allocation8 [shape = 'u8[8192]{0}', space=vmem, size = 0x2000, scoped, tag = 'output window, operand 0']
    %15 = vsyncpa [#allocation3], 0
    %s16 = scalar_lea.sflag [#allocation3], 1
    %17 = vsyncpa %s16, 0
    %18 = vsyncpa [#allocation6], 0
    %19 = vsyncpa [#allocation4], 0
    %s20 = scalar_lea.sflag [#allocation4], 1
    %21 = vsyncpa %s20, 0
    loop: start=0, step=1, limit=4
    $region2: #{tpu_custom_call.1} parent=1 // loop_pre_header
      _
    $region3: #{tpu_custom_call.1} parent=1 // loop_header
      %s23 = sphi 0, %s27
      %p24 = scmp.ge.s32.totalorder %s23, 4
      %s33 = sphi 0, %s35
      %s36 = sphi 0, %s33
      %s37 = sphi 0, %s36
      %s53 = sphi 0, %s37
      %s59 = sphi 0, %s61
      %s62 = sphi 0, %s59
      %s63 = sphi 0, %s62
      %s79 = sphi 0, %s63
      %s83 = sphi 0, %s83
      %s85 = sphi 0, %s83
      %s86 = sphi 0, %s85
      %s100 = sphi 0, %s86
      %s104 = sphi 0, %s104
      %s106 = sphi 0, %s104
      %s107 = sphi 0, %s106
      %s121 = sphi 0, %s107
      %s125 = sphi 0, %s125
      %s127 = sphi 0, %s125
      %s128 = sphi 0, %s127
      %s142 = sphi 0, %s128
      %s146 = sphi 0, %s146
      %s148 = sphi 0, %s146
      %s149 = sphi 0, %s148
      %s163 = sphi 0, %s149
      %s167 = sphi 0, %s167
      %s169 = sphi 0, %s167
      %s170 = sphi 0, %s169
      %s184 = sphi 0, %s170
      %s188 = sphi 0, %s188
      %s190 = sphi 0, %s188
      %s191 = sphi 0, %s190
      %s205 = sphi 0, %s191
      %s209 = sphi 0, %s209
      %s211 = sphi 0, %s209
      %s212 = sphi 0, %s211
      %s226 = sphi 0, %s212
      %s230 = sphi 0, %s230
      %s232 = sphi 0, %s230
      %s233 = sphi 0, %s232
      %s247 = sphi 0, %s233
      %s253 = sphi 0, %s255
      %s256 = sphi 0, %s253
      %s257 = sphi 0, %s256
      %s273 = sphi 0, %s257
    $region4: #{tpu_custom_call.1} parent=1 // loop_header_branch
      %26 = sbr.rel (%p24) target = $region8
    $region5: #{tpu_custom_call.1} parent=1 // loop_body
      %s28 = ssub.s32 %s23, 1
      %s29 = ssub.s32 %s23, 2
      %s30 = sadd.s32 %s23, 1
      %s31 = ssub.s32 %s23, %s30
      %p32 = scmp.eq.s32.totalorder %s31, 0
      %s34 = sadd.s32 %s33, 1
      %s35 = scalar_select %p32, %s33, %s34
      %p38 = pneg %p32
      %p39 = scmp.eq.s32.totalorder %s23, 1
      %p40 = por %p38, %p39
      %p41 = scmp.ne.s32.totalorder %s33, %s36
      %p42 = scmp.eq.s32.totalorder %s23, 0
      %p43 = por %p41, %p42
      %p44 = scmp.ne.s32.totalorder %s33, %s36
      %p45 = scmp.eq.s32.totalorder %s28, 1
      %p46 = por %p44, %p45
      %p47 = scmp.ne.s32.totalorder %s36, %s37
      %p48 = scmp.eq.s32.totalorder %s28, 0
      %p49 = por %p47, %p48
      %p50 = scmp.ne.s32.totalorder %s36, %s37
      %p51 = scmp.eq.s32.totalorder %s29, 1
      %p52 = por %p50, %p51
      %p54 = scmp.ne.s32.totalorder %s37, %s53
      %p55 = scmp.eq.s32.totalorder %s29, 0
      %p56 = por %p54, %p55
      %s57 = ssub.s32 %s23, %s30
      %p58 = scmp.eq.s32.totalorder %s57, 0
      %s60 = sadd.s32 %s59, 1
      %s61 = scalar_select %p58, %s59, %s60
      %p64 = pneg %p58
      %p65 = scmp.eq.s32.totalorder %s23, 1
      %p66 = por %p64, %p65
      %p67 = scmp.ne.s32.totalorder %s59, %s62
      %p68 = scmp.eq.s32.totalorder %s23, 0
      %p69 = por %p67, %p68
      %p70 = scmp.ne.s32.totalorder %s59, %s62
      %p71 = scmp.eq.s32.totalorder %s28, 1
      %p72 = por %p70, %p71
      %p73 = scmp.ne.s32.totalorder %s62, %s63
      %p74 = scmp.eq.s32.totalorder %s28, 0
      %p75 = por %p73, %p74
      %p76 = scmp.ne.s32.totalorder %s62, %s63
      %p77 = scmp.eq.s32.totalorder %s29, 1
      %p78 = por %p76, %p77
      %p80 = scmp.ne.s32.totalorder %s63, %s79
      %p81 = scmp.eq.s32.totalorder %s29, 0
      %p82 = por %p80, %p81
      %s84 = sadd.s32 %s83, 1
      %p87 = scmp.eq.s32.totalorder %s23, 1
      %p88 = scmp.ne.s32.totalorder %s83, %s85
      %p89 = scmp.eq.s32.totalorder %s23, 0
      %p90 = por %p88, %p89
      %p91 = scmp.ne.s32.totalorder %s83, %s85
      %p92 = scmp.eq.s32.totalorder %s28, 1
      %p93 = por %p91, %p92
      %p94 = scmp.ne.s32.totalorder %s85, %s86
      %p95 = scmp.eq.s32.totalorder %s28, 0
      %p96 = por %p94, %p95
      %p97 = scmp.ne.s32.totalorder %s85, %s86
      %p98 = scmp.eq.s32.totalorder %s29, 1
      %p99 = por %p97, %p98
      %p101 = scmp.ne.s32.totalorder %s86, %s100
      %p102 = scmp.eq.s32.totalorder %s29, 0
      %p103 = por %p101, %p102
      %s105 = sadd.s32 %s104, 1
      %p108 = scmp.eq.s32.totalorder %s23, 1
      %p109 = scmp.ne.s32.totalorder %s104, %s106
      %p110 = scmp.eq.s32.totalorder %s23, 0
      %p111 = por %p109, %p110
      %p112 = scmp.ne.s32.totalorder %s104, %s106
      %p113 = scmp.eq.s32.totalorder %s28, 1
      %p114 = por %p112, %p113
      %p115 = scmp.ne.s32.totalorder %s106, %s107
      %p116 = scmp.eq.s32.totalorder %s28, 0
      %p117 = por %p115, %p116
      %p118 = scmp.ne.s32.totalorder %s106, %s107
      %p119 = scmp.eq.s32.totalorder %s29, 1
      %p120 = por %p118, %p119
      %p122 = scmp.ne.s32.totalorder %s107, %s121
      %p123 = scmp.eq.s32.totalorder %s29, 0
      %p124 = por %p122, %p123
      %s126 = sadd.s32 %s125, 1
      %p129 = scmp.eq.s32.totalorder %s23, 1
      %p130 = scmp.ne.s32.totalorder %s125, %s127
      %p131 = scmp.eq.s32.totalorder %s23, 0
      %p132 = por %p130, %p131
      %p133 = scmp.ne.s32.totalorder %s125, %s127
      %p134 = scmp.eq.s32.totalorder %s28, 1
      %p135 = por %p133, %p134
      %p136 = scmp.ne.s32.totalorder %s127, %s128
      %p137 = scmp.eq.s32.totalorder %s28, 0
      %p138 = por %p136, %p137
      %p139 = scmp.ne.s32.totalorder %s127, %s128
      %p140 = scmp.eq.s32.totalorder %s29, 1
      %p141 = por %p139, %p140
      %p143 = scmp.ne.s32.totalorder %s128, %s142
      %p144 = scmp.eq.s32.totalorder %s29, 0
      %p145 = por %p143, %p144
      %s147 = sadd.s32 %s146, 1
      %p150 = scmp.eq.s32.totalorder %s23, 1
      %p151 = scmp.ne.s32.totalorder %s146, %s148
      %p152 = scmp.eq.s32.totalorder %s23, 0
      %p153 = por %p151, %p152
      %p154 = scmp.ne.s32.totalorder %s146, %s148
      %p155 = scmp.eq.s32.totalorder %s28, 1
      %p156 = por %p154, %p155
      %p157 = scmp.ne.s32.totalorder %s148, %s149
      %p158 = scmp.eq.s32.totalorder %s28, 0
      %p159 = por %p157, %p158
      %p160 = scmp.ne.s32.totalorder %s148, %s149
      %p161 = scmp.eq.s32.totalorder %s29, 1
      %p162 = por %p160, %p161
      %p164 = scmp.ne.s32.totalorder %s149, %s163
      %p165 = scmp.eq.s32.totalorder %s29, 0
      %p166 = por %p164, %p165
      %s168 = sadd.s32 %s167, 1
      %p171 = scmp.eq.s32.totalorder %s23, 1
      %p172 = scmp.ne.s32.totalorder %s167, %s169
      %p173 = scmp.eq.s32.totalorder %s23, 0
      %p174 = por %p172, %p173
      %p175 = scmp.ne.s32.totalorder %s167, %s169
      %p176 = scmp.eq.s32.totalorder %s28, 1
      %p177 = por %p175, %p176
      %p178 = scmp.ne.s32.totalorder %s169, %s170
      %p179 = scmp.eq.s32.totalorder %s28, 0
      %p180 = por %p178, %p179
      %p181 = scmp.ne.s32.totalorder %s169, %s170
      %p182 = scmp.eq.s32.totalorder %s29, 1
      %p183 = por %p181, %p182
      %p185 = scmp.ne.s32.totalorder %s170, %s184
      %p186 = scmp.eq.s32.totalorder %s29, 0
      %p187 = por %p185, %p186
      %s189 = sadd.s32 %s188, 1
      %p192 = scmp.eq.s32.totalorder %s23, 1
      %p193 = scmp.ne.s32.totalorder %s188, %s190
      %p194 = scmp.eq.s32.totalorder %s23, 0
      %p195 = por %p193, %p194
      %p196 = scmp.ne.s32.totalorder %s188, %s190
      %p197 = scmp.eq.s32.totalorder %s28, 1
      %p198 = por %p196, %p197
      %p199 = scmp.ne.s32.totalorder %s190, %s191
      %p200 = scmp.eq.s32.totalorder %s28, 0
      %p201 = por %p199, %p200
      %p202 = scmp.ne.s32.totalorder %s190, %s191
      %p203 = scmp.eq.s32.totalorder %s29, 1
      %p204 = por %p202, %p203
      %p206 = scmp.ne.s32.totalorder %s191, %s205
      %p207 = scmp.eq.s32.totalorder %s29, 0
      %p208 = por %p206, %p207
      %s210 = sadd.s32 %s209, 1
      %p213 = scmp.eq.s32.totalorder %s23, 1
      %p214 = scmp.ne.s32.totalorder %s209, %s211
      %p215 = scmp.eq.s32.totalorder %s23, 0
      %p216 = por %p214, %p215
      %p217 = scmp.ne.s32.totalorder %s209, %s211
      %p218 = scmp.eq.s32.totalorder %s28, 1
      %p219 = por %p217, %p218
      %p220 = scmp.ne.s32.totalorder %s211, %s212
      %p221 = scmp.eq.s32.totalorder %s28, 0
      %p222 = por %p220, %p221
      %p223 = scmp.ne.s32.totalorder %s211, %s212
      %p224 = scmp.eq.s32.totalorder %s29, 1
      %p225 = por %p223, %p224
      %p227 = scmp.ne.s32.totalorder %s212, %s226
      %p228 = scmp.eq.s32.totalorder %s29, 0
      %p229 = por %p227, %p228
      %s231 = sadd.s32 %s230, 1
      %p234 = scmp.eq.s32.totalorder %s23, 1
      %p235 = scmp.ne.s32.totalorder %s230, %s232
      %p236 = scmp.eq.s32.totalorder %s23, 0
      %p237 = por %p235, %p236
      %p238 = scmp.ne.s32.totalorder %s230, %s232
      %p239 = scmp.eq.s32.totalorder %s28, 1
      %p240 = por %p238, %p239
      %p241 = scmp.ne.s32.totalorder %s232, %s233
      %p242 = scmp.eq.s32.totalorder %s28, 0
      %p243 = por %p241, %p242
      %p244 = scmp.ne.s32.totalorder %s232, %s233
      %p245 = scmp.eq.s32.totalorder %s29, 1
      %p246 = por %p244, %p245
      %p248 = scmp.ne.s32.totalorder %s233, %s247
      %p249 = scmp.eq.s32.totalorder %s29, 0
      %p250 = por %p248, %p249
      %s251 = ssub.s32 %s23, %s30
      %p252 = scmp.eq.s32.totalorder %s251, 0
      %s254 = sadd.s32 %s253, 1
      %s255 = scalar_select %p252, %s253, %s254
      %p258 = pneg %p252
      %p259 = scmp.eq.s32.totalorder %s23, 1
      %p260 = por %p258, %p259
      %p261 = scmp.ne.s32.totalorder %s253, %s256
      %p262 = scmp.eq.s32.totalorder %s23, 0
      %p263 = por %p261, %p262
      %p264 = scmp.ne.s32.totalorder %s253, %s256
      %p265 = scmp.eq.s32.totalorder %s28, 1
      %p266 = por %p264, %p265
      %p267 = scmp.ne.s32.totalorder %s256, %s257
      %p268 = scmp.eq.s32.totalorder %s28, 0
      %p269 = por %p267, %p268
      %p270 = scmp.ne.s32.totalorder %s256, %s257
      %p271 = scmp.eq.s32.totalorder %s29, 1
      %p272 = por %p270, %p271
      %p274 = scmp.ne.s32.totalorder %s257, %s273
      %p275 = scmp.eq.s32.totalorder %s29, 0
      %p276 = por %p274, %p275
      %p277 = scmp.le.s32.totalorder 1, %s23
      %p278 = scmp.lt.s32.totalorder %s23, 3
      %p279 = pnand %p277, %p278
      %p280 = pneg %p279
      // Predicated region
      $region9: #{tpu_custom_call.1} parent=5 // pred_check
        _
      $region10: #{tpu_custom_call.1} parent=5 // pred_check_branch
        %282 = sbr.rel (%p279) target = $region12
      $region11: #{tpu_custom_call.1} parent=5 // pred_region
        %s283 = ssub.s32 %s23, 1
        // Predicated region
        $region13: #{tpu_custom_call.1} parent=11 // pred_check
          %p284 = pneg %p96
        $region14: #{tpu_custom_call.1} parent=11 // pred_check_branch
          %286 = sbr.rel (%p284) target = $region16
        $region15: #{tpu_custom_call.1} parent=11 // pred_region
          %s288 = ssub.s32 16384, 16384
          %289 = vsyncadd [#allocation6], %s288
          %s290 = sshll.u32 [#allocation5], 4
          %s291 = int_to_ptr.vmem [resolvable:$true] %s290
          %296 = dma.hbm_to_vmem [thread:$0]  %s2, 16384, %s291, [#allocation6], 128, 128, 8
        $region16: #{tpu_custom_call.1} parent=11 // pred_fallthru
          _
        // Predicated region
        $region17: #{tpu_custom_call.1} parent=11 // pred_check
          %p297 = pneg %p117
        $region18: #{tpu_custom_call.1} parent=11 // pred_check_branch
          %299 = sbr.rel (%p297) target = $region20
        $region19: #{tpu_custom_call.1} parent=11 // pred_region
          _
        $region20: #{tpu_custom_call.1} parent=11 // pred_fallthru
          _
        // Predicated region
        $region21: #{tpu_custom_call.1} parent=11 // pred_check
          %p300 = pneg %p138
        $region22: #{tpu_custom_call.1} parent=11 // pred_check_branch
          %302 = sbr.rel (%p300) target = $region24
        $region23: #{tpu_custom_call.1} parent=11 // pred_region
          _
        $region24: #{tpu_custom_call.1} parent=11 // pred_fallthru
          _
        // Predicated region
        $region25: #{tpu_custom_call.1} parent=11 // pred_check
          %p303 = pneg %p159
        $region26: #{tpu_custom_call.1} parent=11 // pred_check_branch
          %305 = sbr.rel (%p303) target = $region28
        $region27: #{tpu_custom_call.1} parent=11 // pred_region
          _
        $region28: #{tpu_custom_call.1} parent=11 // pred_fallthru
          _
        // Predicated region
        $region29: #{tpu_custom_call.1} parent=11 // pred_check
          %p306 = pneg %p180
        $region30: #{tpu_custom_call.1} parent=11 // pred_check_branch
          %308 = sbr.rel (%p306) target = $region32
        $region31: #{tpu_custom_call.1} parent=11 // pred_region
          _
        $region32: #{tpu_custom_call.1} parent=11 // pred_fallthru
          _
        // Predicated region
        $region33: #{tpu_custom_call.1} parent=11 // pred_check
          %p309 = pneg %p201
        $region34: #{tpu_custom_call.1} parent=11 // pred_check_branch
          %311 = sbr.rel (%p309) target = $region36
        $region35: #{tpu_custom_call.1} parent=11 // pred_region
          _
        $region36: #{tpu_custom_call.1} parent=11 // pred_fallthru
          _
        // Predicated region
        $region37: #{tpu_custom_call.1} parent=11 // pred_check
          %p312 = pneg %p222
        $region38: #{tpu_custom_call.1} parent=11 // pred_check_branch
          %314 = sbr.rel (%p312) target = $region40
        $region39: #{tpu_custom_call.1} parent=11 // pred_region
          %s316 = ssub.s32 1536, 1536
          %317 = vsyncadd [#allocation6], %s316
          %s318 = sshll.u32 [#allocation7], 4
          %s319 = int_to_ptr.vmem [resolvable:$true] %s318
          %324 = dma.hbm_to_vmem [thread:$0]  %s8, 1536, %s319, [#allocation6], 64, 64, 4
        $region40: #{tpu_custom_call.1} parent=11 // pred_fallthru
          _
        // Predicated region
        $region41: #{tpu_custom_call.1} parent=11 // pred_check
          %p325 = pneg %p243
        $region42: #{tpu_custom_call.1} parent=11 // pred_check_branch
          %327 = sbr.rel (%p325) target = $region44
        $region43: #{tpu_custom_call.1} parent=11 // pred_region
          _
        $region44: #{tpu_custom_call.1} parent=11 // pred_fallthru
          _
      $region12: #{tpu_custom_call.1} parent=5 // pred_fallthru
        _
      %p328 = scmp.lt.s32.totalorder %s23, 2
      // Predicated region
      $region45: #{tpu_custom_call.1} parent=5 // pred_check
        %p329 = pneg %p328
      $region46: #{tpu_custom_call.1} parent=5 // pred_check_branch
        %331 = sbr.rel (%p329) target = $region48
      $region47: #{tpu_custom_call.1} parent=5 // pred_region
        // Predicated region
        $region49: #{tpu_custom_call.1} parent=47 // pred_check
          %p332 = pneg %p43
        $region50: #{tpu_custom_call.1} parent=47 // pred_check_branch
          %334 = sbr.rel (%p332) target = $region52
        $region51: #{tpu_custom_call.1} parent=47 // pred_region
          %p335 = scmp.lt.s32.totalorder %s23, 1
          %s336 = scalar_select %p335, %s23, 1
          %s337 = smul.addr %s336, 8
          %s338 = smul.addr %s337, 8
          %s339 = scalar_lea.vmem %s0, %s338
        $region52: #{tpu_custom_call.1} parent=47 // pred_fallthru
          _
        // Predicated region
        $region53: #{tpu_custom_call.1} parent=47 // pred_check
          %p340 = pneg %p69
        $region54: #{tpu_custom_call.1} parent=47 // pred_check_branch
          %342 = sbr.rel (%p340) target = $region56
        $region55: #{tpu_custom_call.1} parent=47 // pred_region
          %s343 = sand.u32 %s59, 1
          %s344 = scalar_lea.sflag [#allocation3], %s343
          %s345 = sand.u32 %s59, 1
          %s346 = smul.addr %s345, 64
          %s347 = scalar_lea.vmem [#allocation2], %s346
          %s349 = ssub.s32 1024, 1024
          %350 = vsyncadd %s344, %s349
          %s351 = smul.addr %s23, 8
          %s352 = smul.addr %s351, 128
          %s353 = scalar_lea.hbm %s1, %s352
          %s355 = sshll.u32 %s347, 4
          %s356 = int_to_ptr.vmem [resolvable:$true] %s355
          %358 = dma.hbm_to_vmem [thread:$0]  %s353, 1024, %s356, %s344
        $region56: #{tpu_custom_call.1} parent=47 // pred_fallthru
          _
      $region48: #{tpu_custom_call.1} parent=5 // pred_fallthru
        _
      %p359 = scmp.le.s32.totalorder 1, %s23
      %p360 = scmp.lt.s32.totalorder %s23, 3
      %p361 = pnand %p359, %p360
      %p362 = pneg %p361
      // Predicated region
      $region57: #{tpu_custom_call.1} parent=5 // pred_check
        _
      $region58: #{tpu_custom_call.1} parent=5 // pred_check_branch
        %364 = sbr.rel (%p361) target = $region60
      $region59: #{tpu_custom_call.1} parent=5 // pred_region
        %s365 = ssub.s32 %s23, 1
        %s366 = sand.u32 %s62, 1
        %s367 = scalar_lea.sflag [#allocation3], %s366
        %s368 = sand.u32 %s62, 1
        %s369 = smul.addr %s368, 64
        %s370 = scalar_lea.vmem [#allocation2], %s369
        // Predicated region
        $region61: #{tpu_custom_call.1} parent=59 // pred_check
          %p371 = pneg %p75
        $region62: #{tpu_custom_call.1} parent=59 // pred_check_branch
          %373 = sbr.rel (%p371) target = $region64
        $region63: #{tpu_custom_call.1} parent=59 // pred_region
          %374 = dma.done %s367, 1024
        $region64: #{tpu_custom_call.1} parent=59 // pred_fallthru
          _
        // Predicated region
        $region65: #{tpu_custom_call.1} parent=59 // pred_check
          %p375 = pneg %p96
        $region66: #{tpu_custom_call.1} parent=59 // pred_check_branch
          %377 = sbr.rel (%p375) target = $region68
        $region67: #{tpu_custom_call.1} parent=59 // pred_region
          %378 = dma.done [#allocation6], 16384
        $region68: #{tpu_custom_call.1} parent=59 // pred_fallthru
          _
        // Predicated region
        $region69: #{tpu_custom_call.1} parent=59 // pred_check
          %p379 = pneg %p222
        $region70: #{tpu_custom_call.1} parent=59 // pred_check_branch
          %381 = sbr.rel (%p379) target = $region72
        $region71: #{tpu_custom_call.1} parent=59 // pred_region
          %382 = dma.done [#allocation6], 1536
        $region72: #{tpu_custom_call.1} parent=59 // pred_fallthru
          _
        %p383 = scmp.lt.s32.totalorder %s28, 1
        %s384 = scalar_select %p383, %s28, 1
        %s385 = smul.addr %s384, 8
        %s386 = smul.addr %s385, 8
        %s387 = scalar_lea.vmem %s0, %s386
        %p388 = pneg %p49
        %p389 = pneg %p46
        %s390 = sand.u32 %s62, 1
        %s391 = scalar_lea.sflag [#allocation3], %s390
        %s392 = sand.u32 %s62, 1
        %s393 = smul.addr %s392, 64
        %s394 = scalar_lea.vmem [#allocation2], %s393
        %p395 = pneg %p75
        %p396 = pneg %p72
        %p397 = pneg %p96
        %p398 = pneg %p93
        %p399 = pneg %p117
        %p400 = pneg %p114
        %p401 = pneg %p138
        %p402 = pneg %p135
        %p403 = pneg %p159
        %p404 = pneg %p156
        %p405 = pneg %p180
        %p406 = pneg %p177
        %p407 = pneg %p201
        %p408 = pneg %p198
        %p409 = pneg %p222
        %p410 = pneg %p219
        %p411 = pneg %p243
        %p412 = pneg %p240
        %p413 = pneg %p269
        %p414 = pneg %p266
        %s415 = sand.u32 %s256, 1
        %s416 = scalar_lea.sflag [#allocation4], %s415
        %s417 = sand.u32 %s256, 1
        %s418 = smul.addr %s417, 8
        %s419 = scalar_lea.vmem [#allocation8], %s418
        %p420 = scmp.lt.s32.totalorder %s28, 1
        %s421 = scalar_select %p420, %s28, 1
        %s422 = smul.addr %s421, 8
        %s423 = smul.addr %s422, 8
        %s424 = scalar_lea.vmem %s0, %s423
        %v426 = vld [vmem:[%s424] sm:$0xff]
        %v427 = vld [vmem:[%s424 + $0x8] sm:$0xff]
        %v428 = vld [vmem:[%s424 + $0x10] sm:$0xff]
        %v429 = vld [vmem:[%s424 + $0x18] sm:$0xff]
        %v430 = vld [vmem:[%s424 + $0x20] sm:$0xff]
        %v431 = vld [vmem:[%s424 + $0x28] sm:$0xff]
        %v432 = vld [vmem:[%s424 + $0x30] sm:$0xff]
        %v433 = vld [vmem:[%s424 + $0x38] sm:$0xff]
        %v434 = vld [vmem:[%s370] sm:$0xff]
        %v435 = vld [vmem:[%s370 + $0x8] sm:$0xff]
        %v436 = vld [vmem:[%s370 + $0x10] sm:$0xff]
        %v437 = vld [vmem:[%s370 + $0x18] sm:$0xff]
        %v438 = vld [vmem:[%s370 + $0x20] sm:$0xff]
        %v439 = vld [vmem:[%s370 + $0x28] sm:$0xff]
        %v440 = vld [vmem:[%s370 + $0x30] sm:$0xff]
        %v441 = vld [vmem:[%s370 + $0x38] sm:$0xff]
        %v442 = vpack.c.bf16 %v434, %v426
        %v443 = vpack.c.bf16 %v435, %v427
        %v444 = vpack.c.bf16 %v436, %v428
        %v445 = vpack.c.bf16 %v437, %v429
        %v446 = vpack.c.bf16 %v438, %v430
        %v447 = vpack.c.bf16 %v439, %v431
        %v448 = vpack.c.bf16 %v440, %v432
        %v449 = vpack.c.bf16 %v441, %v433
        %v450 = vld [vmem:[#allocation5] sm:$0xff]
        %v451 = vld [vmem:[#allocation5 + $0x8] sm:$0xff]
        %v452 = vld [vmem:[#allocation5 + $0x10] sm:$0xff]
        %v453 = vld [vmem:[#allocation5 + $0x18] sm:$0xff]
        %v454 = vld [vmem:[#allocation5 + $0x20] sm:$0xff]
        %v455 = vld [vmem:[#allocation5 + $0x28] sm:$0xff]
        %v456 = vld [vmem:[#allocation5 + $0x30] sm:$0xff]
        %v457 = vld [vmem:[#allocation5 + $0x38] sm:$0xff]
        %v458 = vld [vmem:[#allocation5 + $0x40] sm:$0xff]
        %v459 = vld [vmem:[#allocation5 + $0x48] sm:$0xff]
        %v460 = vld [vmem:[#allocation5 + $0x50] sm:$0xff]
        %v461 = vld [vmem:[#allocation5 + $0x58] sm:$0xff]
        %v462 = vld [vmem:[#allocation5 + $0x60] sm:$0xff]
        %v463 = vld [vmem:[#allocation5 + $0x68] sm:$0xff]
        %v464 = vld [vmem:[#allocation5 + $0x70] sm:$0xff]
        %v465 = vld [vmem:[#allocation5 + $0x78] sm:$0xff]
        %v466 = vld [vmem:[#allocation5 + $0x80] sm:$0xff]
        %v467 = vld [vmem:[#allocation5 + $0x88] sm:$0xff]
        %v468 = vld [vmem:[#allocation5 + $0x90] sm:$0xff]
        %v469 = vld [vmem:[#allocation5 + $0x98] sm:$0xff]
        %v470 = vld [vmem:[#allocation5 + $0xa0] sm:$0xff]
        %v471 = vld [vmem:[#allocation5 + $0xa8] sm:$0xff]
        %v472 = vld [vmem:[#allocation5 + $0xb0] sm:$0xff]
        %v473 = vld [vmem:[#allocation5 + $0xb8] sm:$0xff]
        %v474 = vld [vmem:[#allocation5 + $0xc0] sm:$0xff]
        %v475 = vld [vmem:[#allocation5 + $0xc8] sm:$0xff]
        %v476 = vld [vmem:[#allocation5 + $0xd0] sm:$0xff]
        %v477 = vld [vmem:[#allocation5 + $0xd8] sm:$0xff]
        %v478 = vld [vmem:[#allocation5 + $0xe0] sm:$0xff]
        %v479 = vld [vmem:[#allocation5 + $0xe8] sm:$0xff]
        %v480 = vld [vmem:[#allocation5 + $0xf0] sm:$0xff]
        %v481 = vld [vmem:[#allocation5 + $0xf8] sm:$0xff]
        %v482 = vld [vmem:[#allocation5 + $0x100] sm:$0xff]
        %v483 = vld [vmem:[#allocation5 + $0x108] sm:$0xff]
        %v484 = vld [vmem:[#allocation5 + $0x110] sm:$0xff]
        %v485 = vld [vmem:[#allocation5 + $0x118] sm:$0xff]
        %v486 = vld [vmem:[#allocation5 + $0x120] sm:$0xff]
        %v487 = vld [vmem:[#allocation5 + $0x128] sm:$0xff]
        %v488 = vld [vmem:[#allocation5 + $0x130] sm:$0xff]
        %v489 = vld [vmem:[#allocation5 + $0x138] sm:$0xff]
        %v490 = vld [vmem:[#allocation5 + $0x140] sm:$0xff]
        %v491 = vld [vmem:[#allocation5 + $0x148] sm:$0xff]
        %v492 = vld [vmem:[#allocation5 + $0x150] sm:$0xff]
        %v493 = vld [vmem:[#allocation5 + $0x158] sm:$0xff]
        %v494 = vld [vmem:[#allocation5 + $0x160] sm:$0xff]
        %v495 = vld [vmem:[#allocation5 + $0x168] sm:$0xff]
        %v496 = vld [vmem:[#allocation5 + $0x170] sm:$0xff]
        %v497 = vld [vmem:[#allocation5 + $0x178] sm:$0xff]
        %v498 = vld [vmem:[#allocation5 + $0x180] sm:$0xff]
        %v499 = vld [vmem:[#allocation5 + $0x188] sm:$0xff]
        %v500 = vld [vmem:[#allocation5 + $0x190] sm:$0xff]
        %v501 = vld [vmem:[#allocation5 + $0x198] sm:$0xff]
        %v502 = vld [vmem:[#allocation5 + $0x1a0] sm:$0xff]
        %v503 = vld [vmem:[#allocation5 + $0x1a8] sm:$0xff]
        %v504 = vld [vmem:[#allocation5 + $0x1b0] sm:$0xff]
        %v505 = vld [vmem:[#allocation5 + $0x1b8] sm:$0xff]
        %v506 = vld [vmem:[#allocation5 + $0x1c0] sm:$0xff]
        %v507 = vld [vmem:[#allocation5 + $0x1c8] sm:$0xff]
        %v508 = vld [vmem:[#allocation5 + $0x1d0] sm:$0xff]
        %v509 = vld [vmem:[#allocation5 + $0x1d8] sm:$0xff]
        %v510 = vld [vmem:[#allocation5 + $0x1e0] sm:$0xff]
        %v511 = vld [vmem:[#allocation5 + $0x1e8] sm:$0xff]
        %v512 = vld [vmem:[#allocation5 + $0x1f0] sm:$0xff]
        %v513 = vld [vmem:[#allocation5 + $0x1f8] sm:$0xff]
        %v514 = vld [vmem:[#allocation5 + $0x200] sm:$0xff]
        %v515 = vld [vmem:[#allocation5 + $0x208] sm:$0xff]
        %v516 = vld [vmem:[#allocation5 + $0x210] sm:$0xff]
        %v517 = vld [vmem:[#allocation5 + $0x218] sm:$0xff]
        %v518 = vld [vmem:[#allocation5 + $0x220] sm:$0xff]
        %v519 = vld [vmem:[#allocation5 + $0x228] sm:$0xff]
        %v520 = vld [vmem:[#allocation5 + $0x230] sm:$0xff]
        %v521 = vld [vmem:[#allocation5 + $0x238] sm:$0xff]
        %v522 = vld [vmem:[#allocation5 + $0x240] sm:$0xff]
        %v523 = vld [vmem:[#allocation5 + $0x248] sm:$0xff]
        %v524 = vld [vmem:[#allocation5 + $0x250] sm:$0xff]
        %v525 = vld [vmem:[#allocation5 + $0x258] sm:$0xff]
        %v526 = vld [vmem:[#allocation5 + $0x260] sm:$0xff]
        %v527 = vld [vmem:[#allocation5 + $0x268] sm:$0xff]
        %v528 = vld [vmem:[#allocation5 + $0x270] sm:$0xff]
        %v529 = vld [vmem:[#allocation5 + $0x278] sm:$0xff]
        %v530 = vld [vmem:[#allocation5 + $0x280] sm:$0xff]
        %v531 = vld [vmem:[#allocation5 + $0x288] sm:$0xff]
        %v532 = vld [vmem:[#allocation5 + $0x290] sm:$0xff]
        %v533 = vld [vmem:[#allocation5 + $0x298] sm:$0xff]
        %v534 = vld [vmem:[#allocation5 + $0x2a0] sm:$0xff]
        %v535 = vld [vmem:[#allocation5 + $0x2a8] sm:$0xff]
        %v536 = vld [vmem:[#allocation5 + $0x2b0] sm:$0xff]
        %v537 = vld [vmem:[#allocation5 + $0x2b8] sm:$0xff]
        %v538 = vld [vmem:[#allocation5 + $0x2c0] sm:$0xff]
        %v539 = vld [vmem:[#allocation5 + $0x2c8] sm:$0xff]
        %v540 = vld [vmem:[#allocation5 + $0x2d0] sm:$0xff]
        %v541 = vld [vmem:[#allocation5 + $0x2d8] sm:$0xff]
        %v542 = vld [vmem:[#allocation5 + $0x2e0] sm:$0xff]
        %v543 = vld [vmem:[#allocation5 + $0x2e8] sm:$0xff]
        %v544 = vld [vmem:[#allocation5 + $0x2f0] sm:$0xff]
        %v545 = vld [vmem:[#allocation5 + $0x2f8] sm:$0xff]
        %v546 = vld [vmem:[#allocation5 + $0x300] sm:$0xff]
        %v547 = vld [vmem:[#allocation5 + $0x308] sm:$0xff]
        %v548 = vld [vmem:[#allocation5 + $0x310] sm:$0xff]
        %v549 = vld [vmem:[#allocation5 + $0x318] sm:$0xff]
        %v550 = vld [vmem:[#allocation5 + $0x320] sm:$0xff]
        %v551 = vld [vmem:[#allocation5 + $0x328] sm:$0xff]
        %v552 = vld [vmem:[#allocation5 + $0x330] sm:$0xff]
        %v553 = vld [vmem:[#allocation5 + $0x338] sm:$0xff]
        %v554 = vld [vmem:[#allocation5 + $0x340] sm:$0xff]
        %v555 = vld [vmem:[#allocation5 + $0x348] sm:$0xff]
        %v556 = vld [vmem:[#allocation5 + $0x350] sm:$0xff]
        %v557 = vld [vmem:[#allocation5 + $0x358] sm:$0xff]
        %v558 = vld [vmem:[#allocation5 + $0x360] sm:$0xff]
        %v559 = vld [vmem:[#allocation5 + $0x368] sm:$0xff]
        %v560 = vld [vmem:[#allocation5 + $0x370] sm:$0xff]
        %v561 = vld [vmem:[#allocation5 + $0x378] sm:$0xff]
        %v562 = vld [vmem:[#allocation5 + $0x380] sm:$0xff]
        %v563 = vld [vmem:[#allocation5 + $0x388] sm:$0xff]
        %v564 = vld [vmem:[#allocation5 + $0x390] sm:$0xff]
        %v565 = vld [vmem:[#allocation5 + $0x398] sm:$0xff]
        %v566 = vld [vmem:[#allocation5 + $0x3a0] sm:$0xff]
        %v567 = vld [vmem:[#allocation5 + $0x3a8] sm:$0xff]
        %v568 = vld [vmem:[#allocation5 + $0x3b0] sm:$0xff]
        %v569 = vld [vmem:[#allocation5 + $0x3b8] sm:$0xff]
        %v570 = vld [vmem:[#allocation5 + $0x3c0] sm:$0xff]
        %v571 = vld [vmem:[#allocation5 + $0x3c8] sm:$0xff]
        %v572 = vld [vmem:[#allocation5 + $0x3d0] sm:$0xff]
        %v573 = vld [vmem:[#allocation5 + $0x3d8] sm:$0xff]
        %v574 = vld [vmem:[#allocation5 + $0x3e0] sm:$0xff]
        %v575 = vld [vmem:[#allocation5 + $0x3e8] sm:$0xff]
        %v576 = vld [vmem:[#allocation5 + $0x3f0] sm:$0xff]
        %v577 = vld [vmem:[#allocation5 + $0x3f8] sm:$0xff]
        %v578 = vld [vmem:[%s3] sm:$0x3]
        %v580 = vlaneseq
        %v581 = vshrl.u32 %v580, 7
        %v582 = vsub.s32 0, %v581
        %v583 = vrot.slane %v578, %v582
        %v584 = vlaneseq
        %v585 = vshrl.u32 %v584, 7
        %v586 = vsub.s32 1, %v585
        %v587 = vrot.slane %v578, %v586
        %v718 = vunpack.c.l.b16 %v450
        %v719 = vunpack.c.h.b16 %v450
        %v720 = vunpack.c.l.b16 %v451
        %v721 = vunpack.c.h.b16 %v451
        %v722 = vunpack.c.l.b16 %v452
        %v723 = vunpack.c.h.b16 %v452
        %v724 = vunpack.c.l.b16 %v453
        %v725 = vunpack.c.h.b16 %v453
        %v726 = vunpack.c.l.b16 %v454
        %v727 = vunpack.c.h.b16 %v454
        %v728 = vunpack.c.l.b16 %v455
        %v729 = vunpack.c.h.b16 %v455
        %v730 = vunpack.c.l.b16 %v456
        %v731 = vunpack.c.h.b16 %v456
        %v732 = vunpack.c.l.b16 %v457
        %v733 = vunpack.c.h.b16 %v457
        %v734 = vunpack.c.l.b16 %v458
        %v735 = vunpack.c.h.b16 %v458
        %v736 = vunpack.c.l.b16 %v459
        %v737 = vunpack.c.h.b16 %v459
        %v738 = vunpack.c.l.b16 %v460
        %v739 = vunpack.c.h.b16 %v460
        %v740 = vunpack.c.l.b16 %v461
        %v741 = vunpack.c.h.b16 %v461
        %v742 = vunpack.c.l.b16 %v462
        %v743 = vunpack.c.h.b16 %v462
        %v744 = vunpack.c.l.b16 %v463
        %v745 = vunpack.c.h.b16 %v463
        %v746 = vunpack.c.l.b16 %v464
        %v747 = vunpack.c.h.b16 %v464
        %v748 = vunpack.c.l.b16 %v465
        %v749 = vunpack.c.h.b16 %v465
        %v750 = vunpack.c.l.b16 %v466
        %v751 = vunpack.c.h.b16 %v466
        %v752 = vunpack.c.l.b16 %v467
        %v753 = vunpack.c.h.b16 %v467
        %v754 = vunpack.c.l.b16 %v468
        %v755 = vunpack.c.h.b16 %v468
        %v756 = vunpack.c.l.b16 %v469
        %v757 = vunpack.c.h.b16 %v469
        %v758 = vunpack.c.l.b16 %v470
        %v759 = vunpack.c.h.b16 %v470
        %v760 = vunpack.c.l.b16 %v471
        %v761 = vunpack.c.h.b16 %v471
        %v762 = vunpack.c.l.b16 %v472
        %v763 = vunpack.c.h.b16 %v472
        %v764 = vunpack.c.l.b16 %v473
        %v765 = vunpack.c.h.b16 %v473
        %v766 = vunpack.c.l.b16 %v474
        %v767 = vunpack.c.h.b16 %v474
        %v768 = vunpack.c.l.b16 %v475
        %v769 = vunpack.c.h.b16 %v475
        %v770 = vunpack.c.l.b16 %v476
        %v771 = vunpack.c.h.b16 %v476
        %v772 = vunpack.c.l.b16 %v477
        %v773 = vunpack.c.h.b16 %v477
        %v774 = vunpack.c.l.b16 %v478
        %v775 = vunpack.c.h.b16 %v478
        %v776 = vunpack.c.l.b16 %v479
        %v777 = vunpack.c.h.b16 %v479
        %v778 = vunpack.c.l.b16 %v480
        %v779 = vunpack.c.h.b16 %v480
        %v780 = vunpack.c.l.b16 %v481
        %v781 = vunpack.c.h.b16 %v481
        %v782 = vunpack.c.l.b16 %v482
        %v783 = vunpack.c.h.b16 %v482
        %v784 = vunpack.c.l.b16 %v483
        %v785 = vunpack.c.h.b16 %v483
        %v786 = vunpack.c.l.b16 %v484
        %v787 = vunpack.c.h.b16 %v484
        %v788 = vunpack.c.l.b16 %v485
        %v789 = vunpack.c.h.b16 %v485
        %v790 = vunpack.c.l.b16 %v486
        %v791 = vunpack.c.h.b16 %v486
        %v792 = vunpack.c.l.b16 %v487
        %v793 = vunpack.c.h.b16 %v487
        %v794 = vunpack.c.l.b16 %v488
        %v795 = vunpack.c.h.b16 %v488
        %v796 = vunpack.c.l.b16 %v489
        %v797 = vunpack.c.h.b16 %v489
        %v798 = vunpack.c.l.b16 %v490
        %v799 = vunpack.c.h.b16 %v490
        %v800 = vunpack.c.l.b16 %v491
        %v801 = vunpack.c.h.b16 %v491
        %v802 = vunpack.c.l.b16 %v492
        %v803 = vunpack.c.h.b16 %v492
        %v804 = vunpack.c.l.b16 %v493
        %v805 = vunpack.c.h.b16 %v493
        %v806 = vunpack.c.l.b16 %v494
        %v807 = vunpack.c.h.b16 %v494
        %v808 = vunpack.c.l.b16 %v495
        %v809 = vunpack.c.h.b16 %v495
        %v810 = vunpack.c.l.b16 %v496
        %v811 = vunpack.c.h.b16 %v496
        %v812 = vunpack.c.l.b16 %v497
        %v813 = vunpack.c.h.b16 %v497
        %v814 = vunpack.c.l.b16 %v498
        %v815 = vunpack.c.h.b16 %v498
        %v816 = vunpack.c.l.b16 %v499
        %v817 = vunpack.c.h.b16 %v499
        %v818 = vunpack.c.l.b16 %v500
        %v819 = vunpack.c.h.b16 %v500
        %v820 = vunpack.c.l.b16 %v501
        %v821 = vunpack.c.h.b16 %v501
        %v822 = vunpack.c.l.b16 %v502
        %v823 = vunpack.c.h.b16 %v502
        %v824 = vunpack.c.l.b16 %v503
        %v825 = vunpack.c.h.b16 %v503
        %v826 = vunpack.c.l.b16 %v504
        %v827 = vunpack.c.h.b16 %v504
        %v828 = vunpack.c.l.b16 %v505
        %v829 = vunpack.c.h.b16 %v505
        %v830 = vunpack.c.l.b16 %v506
        %v831 = vunpack.c.h.b16 %v506
        %v832 = vunpack.c.l.b16 %v507
        %v833 = vunpack.c.h.b16 %v507
        %v834 = vunpack.c.l.b16 %v508
        %v835 = vunpack.c.h.b16 %v508
        %v836 = vunpack.c.l.b16 %v509
        %v837 = vunpack.c.h.b16 %v509
        %v838 = vunpack.c.l.b16 %v510
        %v839 = vunpack.c.h.b16 %v510
        %v840 = vunpack.c.l.b16 %v511
        %v841 = vunpack.c.h.b16 %v511
        %v842 = vunpack.c.l.b16 %v512
        %v843 = vunpack.c.h.b16 %v512
        %v844 = vunpack.c.l.b16 %v513
        %v845 = vunpack.c.h.b16 %v513
        %v846 = vunpack.c.l.b16 %v514
        %v847 = vunpack.c.h.b16 %v514
        %v848 = vunpack.c.l.b16 %v515
        %v849 = vunpack.c.h.b16 %v515
        %v850 = vunpack.c.l.b16 %v516
        %v851 = vunpack.c.h.b16 %v516
        %v852 = vunpack.c.l.b16 %v517
        %v853 = vunpack.c.h.b16 %v517
        %v854 = vunpack.c.l.b16 %v518
        %v855 = vunpack.c.h.b16 %v518
        %v856 = vunpack.c.l.b16 %v519
        %v857 = vunpack.c.h.b16 %v519
        %v858 = vunpack.c.l.b16 %v520
        %v859 = vunpack.c.h.b16 %v520
        %v860 = vunpack.c.l.b16 %v521
        %v861 = vunpack.c.h.b16 %v521
        %v862 = vunpack.c.l.b16 %v522
        %v863 = vunpack.c.h.b16 %v522
        %v864 = vunpack.c.l.b16 %v523
        %v865 = vunpack.c.h.b16 %v523
        %v866 = vunpack.c.l.b16 %v524
        %v867 = vunpack.c.h.b16 %v524
        %v868 = vunpack.c.l.b16 %v525
        %v869 = vunpack.c.h.b16 %v525
        %v870 = vunpack.c.l.b16 %v526
        %v871 = vunpack.c.h.b16 %v526
        %v872 = vunpack.c.l.b16 %v527
        %v873 = vunpack.c.h.b16 %v527
        %v874 = vunpack.c.l.b16 %v528
        %v875 = vunpack.c.h.b16 %v528
        %v876 = vunpack.c.l.b16 %v529
        %v877 = vunpack.c.h.b16 %v529
        %v878 = vunpack.c.l.b16 %v530
        %v879 = vunpack.c.h.b16 %v530
        %v880 = vunpack.c.l.b16 %v531
        %v881 = vunpack.c.h.b16 %v531
        %v882 = vunpack.c.l.b16 %v532
        %v883 = vunpack.c.h.b16 %v532
        %v884 = vunpack.c.l.b16 %v533
        %v885 = vunpack.c.h.b16 %v533
        %v886 = vunpack.c.l.b16 %v534
        %v887 = vunpack.c.h.b16 %v534
        %v888 = vunpack.c.l.b16 %v535
        %v889 = vunpack.c.h.b16 %v535
        %v890 = vunpack.c.l.b16 %v536
        %v891 = vunpack.c.h.b16 %v536
        %v892 = vunpack.c.l.b16 %v537
        %v893 = vunpack.c.h.b16 %v537
        %v894 = vunpack.c.l.b16 %v538
        %v895 = vunpack.c.h.b16 %v538
        %v896 = vunpack.c.l.b16 %v539
        %v897 = vunpack.c.h.b16 %v539
        %v898 = vunpack.c.l.b16 %v540
        %v899 = vunpack.c.h.b16 %v540
        %v900 = vunpack.c.l.b16 %v541
        %v901 = vunpack.c.h.b16 %v541
        %v902 = vunpack.c.l.b16 %v542
        %v903 = vunpack.c.h.b16 %v542
        %v904 = vunpack.c.l.b16 %v543
        %v905 = vunpack.c.h.b16 %v543
        %v906 = vunpack.c.l.b16 %v544
        %v907 = vunpack.c.h.b16 %v544
        %v908 = vunpack.c.l.b16 %v545
        %v909 = vunpack.c.h.b16 %v545
        %v910 = vunpack.c.l.b16 %v546
        %v911 = vunpack.c.h.b16 %v546
        %v912 = vunpack.c.l.b16 %v547
        %v913 = vunpack.c.h.b16 %v547
        %v914 = vunpack.c.l.b16 %v548
        %v915 = vunpack.c.h.b16 %v548
        %v916 = vunpack.c.l.b16 %v549
        %v917 = vunpack.c.h.b16 %v549
        %v918 = vunpack.c.l.b16 %v550
        %v919 = vunpack.c.h.b16 %v550
        %v920 = vunpack.c.l.b16 %v551
        %v921 = vunpack.c.h.b16 %v551
        %v922 = vunpack.c.l.b16 %v552
        %v923 = vunpack.c.h.b16 %v552
        %v924 = vunpack.c.l.b16 %v553
        %v925 = vunpack.c.h.b16 %v553
        %v926 = vunpack.c.l.b16 %v554
        %v927 = vunpack.c.h.b16 %v554
        %v928 = vunpack.c.l.b16 %v555
        %v929 = vunpack.c.h.b16 %v555
        %v930 = vunpack.c.l.b16 %v556
        %v931 = vunpack.c.h.b16 %v556
        %v932 = vunpack.c.l.b16 %v557
        %v933 = vunpack.c.h.b16 %v557
        %v934 = vunpack.c.l.b16 %v558
        %v935 = vunpack.c.h.b16 %v558
        %v936 = vunpack.c.l.b16 %v559
        %v937 = vunpack.c.h.b16 %v559
        %v938 = vunpack.c.l.b16 %v560
        %v939 = vunpack.c.h.b16 %v560
        %v940 = vunpack.c.l.b16 %v561
        %v941 = vunpack.c.h.b16 %v561
        %v942 = vunpack.c.l.b16 %v562
        %v943 = vunpack.c.h.b16 %v562
        %v944 = vunpack.c.l.b16 %v563
        %v945 = vunpack.c.h.b16 %v563
        %v946 = vunpack.c.l.b16 %v564
        %v947 = vunpack.c.h.b16 %v564
        %v948 = vunpack.c.l.b16 %v565
        %v949 = vunpack.c.h.b16 %v565
        %v950 = vunpack.c.l.b16 %v566
        %v951 = vunpack.c.h.b16 %v566
        %v952 = vunpack.c.l.b16 %v567
        %v953 = vunpack.c.h.b16 %v567
        %v954 = vunpack.c.l.b16 %v568
        %v955 = vunpack.c.h.b16 %v568
        %v956 = vunpack.c.l.b16 %v569
        %v957 = vunpack.c.h.b16 %v569
        %v958 = vunpack.c.l.b16 %v570
        %v959 = vunpack.c.h.b16 %v570
        %v960 = vunpack.c.l.b16 %v571
        %v961 = vunpack.c.h.b16 %v571
        %v962 = vunpack.c.l.b16 %v572
        %v963 = vunpack.c.h.b16 %v572
        %v964 = vunpack.c.l.b16 %v573
        %v965 = vunpack.c.h.b16 %v573
        %v966 = vunpack.c.l.b16 %v574
        %v967 = vunpack.c.h.b16 %v574
        %v968 = vunpack.c.l.b16 %v575
        %v969 = vunpack.c.h.b16 %v575
        %v970 = vunpack.c.l.b16 %v576
        %v971 = vunpack.c.h.b16 %v576
        %v972 = vunpack.c.l.b16 %v577
        %v973 = vunpack.c.h.b16 %v577
        %v974 = vpack.c.b16 %v720, %v718
        %v975 = vpack.c.b16 %v721, %v719
        %v976 = vpack.c.b16 %v724, %v722
        %v977 = vpack.c.b16 %v725, %v723
        %v978 = vpack.c.b16 %v728, %v726
        %v979 = vpack.c.b16 %v729, %v727
        %v980 = vpack.c.b16 %v732, %v730
        %v981 = vpack.c.b16 %v733, %v731
        %v982 = vpack.c.b16 %v736, %v734
        %v983 = vpack.c.b16 %v737, %v735
        %v984 = vpack.c.b16 %v740, %v738
        %v985 = vpack.c.b16 %v741, %v739
        %v986 = vpack.c.b16 %v744, %v742
        %v987 = vpack.c.b16 %v745, %v743
        %v988 = vpack.c.b16 %v748, %v746
        %v989 = vpack.c.b16 %v749, %v747
        %v990 = vpack.c.b16 %v752, %v750
        %v991 = vpack.c.b16 %v753, %v751
        %v992 = vpack.c.b16 %v756, %v754
        %v993 = vpack.c.b16 %v757, %v755
        %v994 = vpack.c.b16 %v760, %v758
        %v995 = vpack.c.b16 %v761, %v759
        %v996 = vpack.c.b16 %v764, %v762
        %v997 = vpack.c.b16 %v765, %v763
        %v998 = vpack.c.b16 %v768, %v766
        %v999 = vpack.c.b16 %v769, %v767
        %v1000 = vpack.c.b16 %v772, %v770
        %v1001 = vpack.c.b16 %v773, %v771
        %v1002 = vpack.c.b16 %v776, %v774
        %v1003 = vpack.c.b16 %v777, %v775
        %v1004 = vpack.c.b16 %v780, %v778
        %v1005 = vpack.c.b16 %v781, %v779
        %v1006 = vpack.c.b16 %v784, %v782
        %v1007 = vpack.c.b16 %v785, %v783
        %v1008 = vpack.c.b16 %v788, %v786
        %v1009 = vpack.c.b16 %v789, %v787
        %v1010 = vpack.c.b16 %v792, %v790
        %v1011 = vpack.c.b16 %v793, %v791
        %v1012 = vpack.c.b16 %v796, %v794
        %v1013 = vpack.c.b16 %v797, %v795
        %v1014 = vpack.c.b16 %v800, %v798
        %v1015 = vpack.c.b16 %v801, %v799
        %v1016 = vpack.c.b16 %v804, %v802
        %v1017 = vpack.c.b16 %v805, %v803
        %v1018 = vpack.c.b16 %v808, %v806
        %v1019 = vpack.c.b16 %v809, %v807
        %v1020 = vpack.c.b16 %v812, %v810
        %v1021 = vpack.c.b16 %v813, %v811
        %v1022 = vpack.c.b16 %v816, %v814
        %v1023 = vpack.c.b16 %v817, %v815
        %v1024 = vpack.c.b16 %v820, %v818
        %v1025 = vpack.c.b16 %v821, %v819
        %v1026 = vpack.c.b16 %v824, %v822
        %v1027 = vpack.c.b16 %v825, %v823
        %v1028 = vpack.c.b16 %v828, %v826
        %v1029 = vpack.c.b16 %v829, %v827
        %v1030 = vpack.c.b16 %v832, %v830
        %v1031 = vpack.c.b16 %v833, %v831
        %v1032 = vpack.c.b16 %v836, %v834
        %v1033 = vpack.c.b16 %v837, %v835
        %v1034 = vpack.c.b16 %v840, %v838
        %v1035 = vpack.c.b16 %v841, %v839
        %v1036 = vpack.c.b16 %v844, %v842
        %v1037 = vpack.c.b16 %v845, %v843
        %v1038 = vpack.c.b16 %v848, %v846
        %v1039 = vpack.c.b16 %v849, %v847
        %v1040 = vpack.c.b16 %v852, %v850
        %v1041 = vpack.c.b16 %v853, %v851
        %v1042 = vpack.c.b16 %v856, %v854
        %v1043 = vpack.c.b16 %v857, %v855
        %v1044 = vpack.c.b16 %v860, %v858
        %v1045 = vpack.c.b16 %v861, %v859
        %v1046 = vpack.c.b16 %v864, %v862
        %v1047 = vpack.c.b16 %v865, %v863
        %v1048 = vpack.c.b16 %v868, %v866
        %v1049 = vpack.c.b16 %v869, %v867
        %v1050 = vpack.c.b16 %v872, %v870
        %v1051 = vpack.c.b16 %v873, %v871
        %v1052 = vpack.c.b16 %v876, %v874
        %v1053 = vpack.c.b16 %v877, %v875
        %v1054 = vpack.c.b16 %v880, %v878
        %v1055 = vpack.c.b16 %v881, %v879
        %v1056 = vpack.c.b16 %v884, %v882
        %v1057 = vpack.c.b16 %v885, %v883
        %v1058 = vpack.c.b16 %v888, %v886
        %v1059 = vpack.c.b16 %v889, %v887
        %v1060 = vpack.c.b16 %v892, %v890
        %v1061 = vpack.c.b16 %v893, %v891
        %v1062 = vpack.c.b16 %v896, %v894
        %v1063 = vpack.c.b16 %v897, %v895
        %v1064 = vpack.c.b16 %v900, %v898
        %v1065 = vpack.c.b16 %v901, %v899
        %v1066 = vpack.c.b16 %v904, %v902
        %v1067 = vpack.c.b16 %v905, %v903
        %v1068 = vpack.c.b16 %v908, %v906
        %v1069 = vpack.c.b16 %v909, %v907
        %v1070 = vpack.c.b16 %v912, %v910
        %v1071 = vpack.c.b16 %v913, %v911
        %v1072 = vpack.c.b16 %v916, %v914
        %v1073 = vpack.c.b16 %v917, %v915
        %v1074 = vpack.c.b16 %v920, %v918
        %v1075 = vpack.c.b16 %v921, %v919
        %v1076 = vpack.c.b16 %v924, %v922
        %v1077 = vpack.c.b16 %v925, %v923
        %v1078 = vpack.c.b16 %v928, %v926
        %v1079 = vpack.c.b16 %v929, %v927
        %v1080 = vpack.c.b16 %v932, %v930
        %v1081 = vpack.c.b16 %v933, %v931
        %v1082 = vpack.c.b16 %v936, %v934
        %v1083 = vpack.c.b16 %v937, %v935
        %v1084 = vpack.c.b16 %v940, %v938
        %v1085 = vpack.c.b16 %v941, %v939
        %v1086 = vpack.c.b16 %v944, %v942
        %v1087 = vpack.c.b16 %v945, %v943
        %v1088 = vpack.c.b16 %v948, %v946
        %v1089 = vpack.c.b16 %v949, %v947
        %v1090 = vpack.c.b16 %v952, %v950
        %v1091 = vpack.c.b16 %v953, %v951
        %v1092 = vpack.c.b16 %v956, %v954
        %v1093 = vpack.c.b16 %v957, %v955
        %v1094 = vpack.c.b16 %v960, %v958
        %v1095 = vpack.c.b16 %v961, %v959
        %v1096 = vpack.c.b16 %v964, %v962
        %v1097 = vpack.c.b16 %v965, %v963
        %v1098 = vpack.c.b16 %v968, %v966
        %v1099 = vpack.c.b16 %v969, %v967
        %v1100 = vpack.c.b16 %v972, %v970
        %v1101 = vpack.c.b16 %v973, %v971
        %1230 = vmatprep.subr.bf16.mxu0 %v989
        %1231 = vmatpush1.bf16.msra.mxu0 %v988
        %1232 = vmatprep.subr.bf16.mxu0 %v987
        %1233 = vmatpush1.bf16.msra.mxu0 %v986
        %1234 = vmatprep.subr.bf16.mxu0 %v985
        %1235 = vmatpush1.bf16.msra.mxu0 %v984
        %1236 = vmatprep.subr.bf16.mxu0 %v983
        %1237 = vmatpush1.bf16.msra.mxu0 %v982
        %1238 = vmatprep.subr.bf16.mxu0 %v981
        %1239 = vmatpush1.bf16.msra.mxu0 %v980
        %1240 = vmatprep.subr.bf16.mxu0 %v979
        %1241 = vmatpush1.bf16.msra.mxu0 %v978
        %1242 = vmatprep.subr.bf16.mxu0 %v977
        %1243 = vmatpush1.bf16.msra.mxu0 %v976
        %1244 = vmatprep.subr.bf16.mxu0 %v975
        %1245 = vmatpush1.bf16.msra.mxu0 %v974
        %1246 = vmatprep.subr.bf16.mxu0 %v1005
        %1247 = vmatpush2.bf16.msra.mxu0 %v1004
        %1248 = vmatprep.subr.bf16.mxu0 %v1003
        %1249 = vmatpush2.bf16.msra.mxu0 %v1002
        %1250 = vmatprep.subr.bf16.mxu0 %v1001
        %1251 = vmatpush2.bf16.msra.mxu0 %v1000
        %1252 = vmatprep.subr.bf16.mxu0 %v999
        %1253 = vmatpush2.bf16.msra.mxu0 %v998
        %1254 = vmatprep.subr.bf16.mxu0 %v997
        %1255 = vmatpush2.bf16.msra.mxu0 %v996
        %1256 = vmatprep.subr.bf16.mxu0 %v995
        %1257 = vmatpush2.bf16.msra.mxu0 %v994
        %1258 = vmatprep.subr.bf16.mxu0 %v993
        %1259 = vmatpush2.bf16.msra.mxu0 %v992
        %1260 = vmatprep.subr.bf16.mxu0 %v991
        %1261 = vmatpush2.bf16.msra.mxu0 %v990
        %1262 = vmatprep.mubr.bf16.mxu0 %v443
        %1263 = vmatmul.mubr.bf16.gmra.mxu0 %v442
        %v1264 = vpop.f32.mrf.mxu0
        %v1265 = vadd.f32 %v583, %v1264
        %v1266 = vpop.f32.mrf.mxu0
        %v1267 = vadd.f32 %v587, %v1266
        %v1268 = vpop.f32.mrf.mxu0
        %v1269 = vadd.f32 %v583, %v1268
        %v1270 = vpop.f32.mrf.mxu0
        %v1271 = vadd.f32 %v587, %v1270
        %1272 = vdwg.mxu0
        %1273 = vmatprep.subr.bf16.mxu0 %v1021
        %1274 = vmatpush1.bf16.msra.mxu0 %v1020
        %1275 = vmatprep.subr.bf16.mxu0 %v1019
        %1276 = vmatpush1.bf16.msra.mxu0 %v1018
        %1277 = vmatprep.subr.bf16.mxu0 %v1017
        %1278 = vmatpush1.bf16.msra.mxu0 %v1016
        %1279 = vmatprep.subr.bf16.mxu0 %v1015
        %1280 = vmatpush1.bf16.msra.mxu0 %v1014
        %1281 = vmatprep.subr.bf16.mxu0 %v1013
        %1282 = vmatpush1.bf16.msra.mxu0 %v1012
        %1283 = vmatprep.subr.bf16.mxu0 %v1011
        %1284 = vmatpush1.bf16.msra.mxu0 %v1010
        %1285 = vmatprep.subr.bf16.mxu0 %v1009
        %1286 = vmatpush1.bf16.msra.mxu0 %v1008
        %1287 = vmatprep.subr.bf16.mxu0 %v1007
        %1288 = vmatpush1.bf16.msra.mxu0 %v1006
        %1289 = vmatprep.subr.bf16.mxu0 %v1037
        %1290 = vmatpush2.bf16.msra.mxu0 %v1036
        %1291 = vmatprep.subr.bf16.mxu0 %v1035
        %1292 = vmatpush2.bf16.msra.mxu0 %v1034
        %1293 = vmatprep.subr.bf16.mxu0 %v1033
        %1294 = vmatpush2.bf16.msra.mxu0 %v1032
        %1295 = vmatprep.subr.bf16.mxu0 %v1031
        %1296 = vmatpush2.bf16.msra.mxu0 %v1030
        %1297 = vmatprep.subr.bf16.mxu0 %v1029
        %1298 = vmatpush2.bf16.msra.mxu0 %v1028
        %1299 = vmatprep.subr.bf16.mxu0 %v1027
        %1300 = vmatpush2.bf16.msra.mxu0 %v1026
        %1301 = vmatprep.subr.bf16.mxu0 %v1025
        %1302 = vmatpush2.bf16.msra.mxu0 %v1024
        %1303 = vmatprep.subr.bf16.mxu0 %v1023
        %1304 = vmatpush2.bf16.msra.mxu0 %v1022
        %1305 = vmatprep.mubr.bf16.mxu0 %v445
        %1306 = vmatmul.mubr.bf16.gmra.mxu0 %v444
        %v1307 = vpop.f32.mrf.mxu0
        %v1308 = vadd.f32 %v1265, %v1307
        %v1309 = vpop.f32.mrf.mxu0
        %v1310 = vadd.f32 %v1267, %v1309
        %v1311 = vpop.f32.mrf.mxu0
        %v1312 = vadd.f32 %v1269, %v1311
        %v1313 = vpop.f32.mrf.mxu0
        %v1314 = vadd.f32 %v1271, %v1313
        %1315 = vdwg.mxu0
        %1316 = vmatprep.subr.bf16.mxu0 %v1053
        %1317 = vmatpush1.bf16.msra.mxu0 %v1052
        %1318 = vmatprep.subr.bf16.mxu0 %v1051
        %1319 = vmatpush1.bf16.msra.mxu0 %v1050
        %1320 = vmatprep.subr.bf16.mxu0 %v1049
        %1321 = vmatpush1.bf16.msra.mxu0 %v1048
        %1322 = vmatprep.subr.bf16.mxu0 %v1047
        %1323 = vmatpush1.bf16.msra.mxu0 %v1046
        %1324 = vmatprep.subr.bf16.mxu0 %v1045
        %1325 = vmatpush1.bf16.msra.mxu0 %v1044
        %1326 = vmatprep.subr.bf16.mxu0 %v1043
        %1327 = vmatpush1.bf16.msra.mxu0 %v1042
        %1328 = vmatprep.subr.bf16.mxu0 %v1041
        %1329 = vmatpush1.bf16.msra.mxu0 %v1040
        %1330 = vmatprep.subr.bf16.mxu0 %v1039
        %1331 = vmatpush1.bf16.msra.mxu0 %v1038
        %1332 = vmatprep.subr.bf16.mxu0 %v1069
        %1333 = vmatpush2.bf16.msra.mxu0 %v1068
        %1334 = vmatprep.subr.bf16.mxu0 %v1067
        %1335 = vmatpush2.bf16.msra.mxu0 %v1066
        %1336 = vmatprep.subr.bf16.mxu0 %v1065
        %1337 = vmatpush2.bf16.msra.mxu0 %v1064
        %1338 = vmatprep.subr.bf16.mxu0 %v1063
        %1339 = vmatpush2.bf16.msra.mxu0 %v1062
        %1340 = vmatprep.subr.bf16.mxu0 %v1061
        %1341 = vmatpush2.bf16.msra.mxu0 %v1060
        %1342 = vmatprep.subr.bf16.mxu0 %v1059
        %1343 = vmatpush2.bf16.msra.mxu0 %v1058
        %1344 = vmatprep.subr.bf16.mxu0 %v1057
        %1345 = vmatpush2.bf16.msra.mxu0 %v1056
        %1346 = vmatprep.subr.bf16.mxu0 %v1055
        %1347 = vmatpush2.bf16.msra.mxu0 %v1054
        %1348 = vmatprep.mubr.bf16.mxu0 %v447
        %1349 = vmatmul.mubr.bf16.gmra.mxu0 %v446
        %v1350 = vpop.f32.mrf.mxu0
        %v1351 = vadd.f32 %v1308, %v1350
        %v1352 = vpop.f32.mrf.mxu0
        %v1353 = vadd.f32 %v1310, %v1352
        %v1354 = vpop.f32.mrf.mxu0
        %v1355 = vadd.f32 %v1312, %v1354
        %v1356 = vpop.f32.mrf.mxu0
        %v1357 = vadd.f32 %v1314, %v1356
        %1358 = vdwg.mxu0
        %1359 = vmatprep.subr.bf16.mxu0 %v1085
        %1360 = vmatpush1.bf16.msra.mxu0 %v1084
        %1361 = vmatprep.subr.bf16.mxu0 %v1083
        %1362 = vmatpush1.bf16.msra.mxu0 %v1082
        %1363 = vmatprep.subr.bf16.mxu0 %v1081
        %1364 = vmatpush1.bf16.msra.mxu0 %v1080
        %1365 = vmatprep.subr.bf16.mxu0 %v1079
        %1366 = vmatpush1.bf16.msra.mxu0 %v1078
        %1367 = vmatprep.subr.bf16.mxu0 %v1077
        %1368 = vmatpush1.bf16.msra.mxu0 %v1076
        %1369 = vmatprep.subr.bf16.mxu0 %v1075
        %1370 = vmatpush1.bf16.msra.mxu0 %v1074
        %1371 = vmatprep.subr.bf16.mxu0 %v1073
        %1372 = vmatpush1.bf16.msra.mxu0 %v1072
        %1373 = vmatprep.subr.bf16.mxu0 %v1071
        %1374 = vmatpush1.bf16.msra.mxu0 %v1070
        %1375 = vmatprep.subr.bf16.mxu0 %v1101
        %1376 = vmatpush2.bf16.msra.mxu0 %v1100
        %1377 = vmatprep.subr.bf16.mxu0 %v1099
        %1378 = vmatpush2.bf16.msra.mxu0 %v1098
        %1379 = vmatprep.subr.bf16.mxu0 %v1097
        %1380 = vmatpush2.bf16.msra.mxu0 %v1096
        %1381 = vmatprep.subr.bf16.mxu0 %v1095
        %1382 = vmatpush2.bf16.msra.mxu0 %v1094
        %1383 = vmatprep.subr.bf16.mxu0 %v1093
        %1384 = vmatpush2.bf16.msra.mxu0 %v1092
        %1385 = vmatprep.subr.bf16.mxu0 %v1091
        %1386 = vmatpush2.bf16.msra.mxu0 %v1090
        %1387 = vmatprep.subr.bf16.mxu0 %v1089
        %1388 = vmatpush2.bf16.msra.mxu0 %v1088
        %1389 = vmatprep.subr.bf16.mxu0 %v1087
        %1390 = vmatpush2.bf16.msra.mxu0 %v1086
        %1391 = vmatprep.mubr.bf16.mxu0 %v449
        %1392 = vmatmul.mubr.bf16.gmra.mxu0 %v448
        %v1393 = vpop.f32.mrf.mxu0
        %v1394 = vadd.f32 %v1351, %v1393
        %v1395 = vpop.f32.mrf.mxu0
        %v1396 = vadd.f32 %v1353, %v1395
        %v1397 = vpop.f32.mrf.mxu0
        %v1398 = vadd.f32 %v1355, %v1397
        %v1399 = vpop.f32.mrf.mxu0
        %v1400 = vadd.f32 %v1357, %v1399
        %1401 = vdwg.mxu0
        %v1402 = vmax.f32 %v1394, 0.0
        %v1403 = vmax.f32 %v1396, 0.0
        %v1404 = vmax.f32 %v1398, 0.0
        %v1405 = vmax.f32 %v1400, 0.0
        %v1406 = vpack.c.bf16 %v1404, %v1402
        %v1407 = vpack.c.bf16 %v1405, %v1403
        %v1408 = vld [vmem:[%s4] sm:$0xf]
        %v1409 = vld [vmem:[%s4 + $0x4] sm:$0xf]
        %v1410 = vld [vmem:[%s4 + $0x8] sm:$0xf]
        %v1411 = vld [vmem:[%s4 + $0xc] sm:$0xf]
        %v1412 = vld [vmem:[%s4 + $0x10] sm:$0xf]
        %v1413 = vld [vmem:[%s4 + $0x14] sm:$0xf]
        %v1414 = vld [vmem:[%s4 + $0x18] sm:$0xf]
        %v1415 = vld [vmem:[%s4 + $0x1c] sm:$0xf]
        %v1416 = vld [vmem:[%s4 + $0x20] sm:$0xf]
        %v1417 = vld [vmem:[%s4 + $0x24] sm:$0xf]
        %v1418 = vld [vmem:[%s4 + $0x28] sm:$0xf]
        %v1419 = vld [vmem:[%s4 + $0x2c] sm:$0xf]
        %v1420 = vld [vmem:[%s4 + $0x30] sm:$0xf]
        %v1421 = vld [vmem:[%s4 + $0x34] sm:$0xf]
        %v1422 = vld [vmem:[%s4 + $0x38] sm:$0xf]
        %v1423 = vld [vmem:[%s4 + $0x3c] sm:$0xf]
        %v1424 = vld [vmem:[%s4 + $0x40] sm:$0xf]
        %v1425 = vld [vmem:[%s4 + $0x44] sm:$0xf]
        %v1426 = vld [vmem:[%s4 + $0x48] sm:$0xf]
        %v1427 = vld [vmem:[%s4 + $0x4c] sm:$0xf]
        %v1428 = vld [vmem:[%s4 + $0x50] sm:$0xf]
        %v1429 = vld [vmem:[%s4 + $0x54] sm:$0xf]
        %v1430 = vld [vmem:[%s4 + $0x58] sm:$0xf]
        %v1431 = vld [vmem:[%s4 + $0x5c] sm:$0xf]
        %v1432 = vld [vmem:[%s4 + $0x60] sm:$0xf]
        %v1433 = vld [vmem:[%s4 + $0x64] sm:$0xf]
        %v1434 = vld [vmem:[%s4 + $0x68] sm:$0xf]
        %v1435 = vld [vmem:[%s4 + $0x6c] sm:$0xf]
        %v1436 = vld [vmem:[%s4 + $0x70] sm:$0xf]
        %v1437 = vld [vmem:[%s4 + $0x74] sm:$0xf]
        %v1438 = vld [vmem:[%s4 + $0x78] sm:$0xf]
        %v1439 = vld [vmem:[%s4 + $0x7c] sm:$0xf]
        %v1440 = vld [vmem:[%s5] sm:$0x1]
        %v1442 = vlaneseq
        %v1443 = vshrl.u32 %v1442, 7
        %v1444 = vsub.s32 0, %v1443
        %v1445 = vrot.slane %v1440, %v1444
        %v1479 = vunpack.c.l.b16 %v1408
        %v1480 = vunpack.c.l.b16 %v1409
        %v1481 = vunpack.c.l.b16 %v1410
        %v1482 = vunpack.c.l.b16 %v1411
        %v1483 = vunpack.c.l.b16 %v1412
        %v1484 = vunpack.c.l.b16 %v1413
        %v1485 = vunpack.c.l.b16 %v1414
        %v1486 = vunpack.c.l.b16 %v1415
        %v1487 = vunpack.c.l.b16 %v1416
        %v1488 = vunpack.c.l.b16 %v1417
        %v1489 = vunpack.c.l.b16 %v1418
        %v1490 = vunpack.c.l.b16 %v1419
        %v1491 = vunpack.c.l.b16 %v1420
        %v1492 = vunpack.c.l.b16 %v1421
        %v1493 = vunpack.c.l.b16 %v1422
        %v1494 = vunpack.c.l.b16 %v1423
        %v1495 = vunpack.c.l.b16 %v1424
        %v1496 = vunpack.c.l.b16 %v1425
        %v1497 = vunpack.c.l.b16 %v1426
        %v1498 = vunpack.c.l.b16 %v1427
        %v1499 = vunpack.c.l.b16 %v1428
        %v1500 = vunpack.c.l.b16 %v1429
        %v1501 = vunpack.c.l.b16 %v1430
        %v1502 = vunpack.c.l.b16 %v1431
        %v1503 = vunpack.c.l.b16 %v1432
        %v1504 = vunpack.c.l.b16 %v1433
        %v1505 = vunpack.c.l.b16 %v1434
        %v1506 = vunpack.c.l.b16 %v1435
        %v1507 = vunpack.c.l.b16 %v1436
        %v1508 = vunpack.c.l.b16 %v1437
        %v1509 = vunpack.c.l.b16 %v1438
        %v1510 = vunpack.c.l.b16 %v1439
        %v1511 = vpack.c.b16 %v1480, %v1479
        %v1512 = vpack.c.b16 %v1482, %v1481
        %v1513 = vpack.c.b16 %v1484, %v1483
        %v1514 = vpack.c.b16 %v1486, %v1485
        %v1515 = vpack.c.b16 %v1488, %v1487
        %v1516 = vpack.c.b16 %v1490, %v1489
        %v1517 = vpack.c.b16 %v1492, %v1491
        %v1518 = vpack.c.b16 %v1494, %v1493
        %v1519 = vpack.c.b16 %v1496, %v1495
        %v1520 = vpack.c.b16 %v1498, %v1497
        %v1521 = vpack.c.b16 %v1500, %v1499
        %v1522 = vpack.c.b16 %v1502, %v1501
        %v1523 = vpack.c.b16 %v1504, %v1503
        %v1524 = vpack.c.b16 %v1506, %v1505
        %v1525 = vpack.c.b16 %v1508, %v1507
        %v1526 = vpack.c.b16 %v1510, %v1509
        %1543 = vmatprep.subr.bf16.mxu0 0
        %1544 = vmatpush1.bf16.msra.mxu0 %v1518
        %1545 = vmatprep.subr.bf16.mxu0 0
        %1546 = vmatpush1.bf16.msra.mxu0 %v1517
        %1547 = vmatprep.subr.bf16.mxu0 0
        %1548 = vmatpush1.bf16.msra.mxu0 %v1516
        %1549 = vmatprep.subr.bf16.mxu0 0
        %1550 = vmatpush1.bf16.msra.mxu0 %v1515
        %1551 = vmatprep.subr.bf16.mxu0 0
        %1552 = vmatpush1.bf16.msra.mxu0 %v1514
        %1553 = vmatprep.subr.bf16.mxu0 0
        %1554 = vmatpush1.bf16.msra.mxu0 %v1513
        %1555 = vmatprep.subr.bf16.mxu0 0
        %1556 = vmatpush1.bf16.msra.mxu0 %v1512
        %1557 = vmatprep.subr.bf16.mxu0 0
        %1558 = vmatpush1.bf16.msra.mxu0 %v1511
        %1559 = vmatprep.subr.bf16.mxu0 0
        %1560 = vmatpush2.bf16.msra.mxu0 %v1526
        %1561 = vmatprep.subr.bf16.mxu0 0
        %1562 = vmatpush2.bf16.msra.mxu0 %v1525
        %1563 = vmatprep.subr.bf16.mxu0 0
        %1564 = vmatpush2.bf16.msra.mxu0 %v1524
        %1565 = vmatprep.subr.bf16.mxu0 0
        %1566 = vmatpush2.bf16.msra.mxu0 %v1523
        %1567 = vmatprep.subr.bf16.mxu0 0
        %1568 = vmatpush2.bf16.msra.mxu0 %v1522
        %1569 = vmatprep.subr.bf16.mxu0 0
        %1570 = vmatpush2.bf16.msra.mxu0 %v1521
        %1571 = vmatprep.subr.bf16.mxu0 0
        %1572 = vmatpush2.bf16.msra.mxu0 %v1520
        %1573 = vmatprep.subr.bf16.mxu0 0
        %1574 = vmatpush2.bf16.msra.mxu0 %v1519
        %1575 = vmatprep.mubr.bf16.mxu0 %v1407
        %1576 = vmatmul.mubr.bf16.gmra.mxu0 %v1406
        %v1577 = vpop.f32.mrf.mxu0
        %v1578 = vadd.f32 %v1445, %v1577
        %v1579 = vpop.f32.mrf.mxu0
        %v1580 = vpop.f32.mrf.mxu0
        %v1581 = vadd.f32 %v1445, %v1580
        %v1582 = vpop.f32.mrf.mxu0
        %1583 = vdwg.mxu0
        %v1584 = vmax.f32 %v1578, 0.0
        %v1585 = vmax.f32 %v1581, 0.0
        %v1586 = vpack.c.bf16 %v1585, %v1584
        %v1587 = vld [vmem:[%s6] sm:$0xf]
        %v1588 = vld [vmem:[%s6 + $0x4] sm:$0xf]
        %v1589 = vld [vmem:[%s6 + $0x8] sm:$0xf]
        %v1590 = vld [vmem:[%s6 + $0xc] sm:$0xf]
        %v1591 = vld [vmem:[%s6 + $0x10] sm:$0xf]
        %v1592 = vld [vmem:[%s6 + $0x14] sm:$0xf]
        %v1593 = vld [vmem:[%s6 + $0x18] sm:$0xf]
        %v1594 = vld [vmem:[%s6 + $0x1c] sm:$0xf]
        %v1595 = vld [vmem:[%s7] sm:$0x1]
        %v1597 = vlaneseq
        %v1598 = vshrl.u32 %v1597, 7
        %v1599 = vsub.s32 0, %v1598
        %v1600 = vrot.slane %v1595, %v1599
        %v1610 = vunpack.c.l.b16 %v1587
        %v1611 = vunpack.c.l.b16 %v1588
        %v1612 = vunpack.c.l.b16 %v1589
        %v1613 = vunpack.c.l.b16 %v1590
        %v1614 = vunpack.c.l.b16 %v1591
        %v1615 = vunpack.c.l.b16 %v1592
        %v1616 = vunpack.c.l.b16 %v1593
        %v1617 = vunpack.c.l.b16 %v1594
        %v1618 = vpack.c.b16 %v1611, %v1610
        %v1619 = vpack.c.b16 %v1613, %v1612
        %v1620 = vpack.c.b16 %v1615, %v1614
        %v1621 = vpack.c.b16 %v1617, %v1616
        %vm1626 = vcmask 523264
        %v1628 = vsel %vm1626, %v1586, 0
        %1630 = vmatprep.subr.bf16.mxu0 0
        %1631 = vmatpush1.bf16.msra.mxu0 0
        %1632 = vmatprep.subr.bf16.mxu0 0
        %1633 = vmatpush1.bf16.msra.mxu0 0
        %1634 = vmatprep.subr.bf16.mxu0 0
        %1635 = vmatpush1.bf16.msra.mxu0 0
        %1636 = vmatprep.subr.bf16.mxu0 0
        %1637 = vmatpush1.bf16.msra.mxu0 0
        %1638 = vmatprep.subr.bf16.mxu0 0
        %1639 = vmatpush1.bf16.msra.mxu0 %v1621
        %1640 = vmatprep.subr.bf16.mxu0 0
        %1641 = vmatpush1.bf16.msra.mxu0 %v1620
        %1642 = vmatprep.subr.bf16.mxu0 0
        %1643 = vmatpush1.bf16.msra.mxu0 %v1619
        %1644 = vmatprep.subr.bf16.mxu0 0
        %1645 = vmatpush1.bf16.msra.mxu0 %v1618
        %1646 = vmatprep.subr.bf16.mxu0 0
        %1647 = vmatpush2.bf16.msra.mxu0 0
        %1648 = vmatprep.subr.bf16.mxu0 0
        %1649 = vmatpush2.bf16.msra.mxu0 0
        %1650 = vmatprep.subr.bf16.mxu0 0
        %1651 = vmatpush2.bf16.msra.mxu0 0
        %1652 = vmatprep.subr.bf16.mxu0 0
        %1653 = vmatpush2.bf16.msra.mxu0 0
        %1654 = vmatprep.subr.bf16.mxu0 0
        %1655 = vmatpush2.bf16.msra.mxu0 0
        %1656 = vmatprep.subr.bf16.mxu0 0
        %1657 = vmatpush2.bf16.msra.mxu0 0
        %1658 = vmatprep.subr.bf16.mxu0 0
        %1659 = vmatpush2.bf16.msra.mxu0 0
        %1660 = vmatprep.subr.bf16.mxu0 0
        %1661 = vmatpush2.bf16.msra.mxu0 0
        %1662 = vmatprep.mubr.bf16.mxu0 0
        %1663 = vmatmul.mubr.bf16.gmra.mxu0 %v1628
        %v1664 = vpop.f32.mrf.mxu0
        %v1665 = vadd.f32 %v1600, %v1664
        %v1666 = vpop.f32.mrf.mxu0
        %v1667 = vpop.f32.mrf.mxu0
        %v1668 = vadd.f32 %v1600, %v1667
        %v1669 = vpop.f32.mrf.mxu0
        %1670 = vdwg.mxu0
        %v1671 = vmax.f32 %v1665, 0.0
        %v1672 = vmax.f32 %v1668, 0.0
        %v1673 = vsub.f32 %v1671, %v1672
        %v1674 = vand.u32 2147483647, %v1673
        %v1675 = vld [vmem:[#allocation7] sm:$0xf]
        %v1676 = vld [vmem:[#allocation7 + $0x4] sm:$0xf]
        %v1677 = vld [vmem:[#allocation7 + $0x8] sm:$0xf]
        %v1678 = vld [vmem:[#allocation7 + $0xc] sm:$0xf]
        %v1679 = vld [vmem:[#allocation7 + $0x10] sm:$0xf]
        %v1680 = vld [vmem:[#allocation7 + $0x14] sm:$0xf]
        %v1681 = vld [vmem:[#allocation7 + $0x18] sm:$0xf]
        %v1682 = vld [vmem:[#allocation7 + $0x1c] sm:$0xf]
        %v1683 = vld [vmem:[#allocation7 + $0x20] sm:$0xf]
        %v1684 = vld [vmem:[#allocation7 + $0x24] sm:$0xf]
        %v1685 = vld [vmem:[#allocation7 + $0x28] sm:$0xf]
        %v1686 = vld [vmem:[#allocation7 + $0x2c] sm:$0xf]
        %v1687 = vld [vmem:[#allocation7 + $0x30] sm:$0xf]
        %v1688 = vld [vmem:[#allocation7 + $0x34] sm:$0xf]
        %v1689 = vld [vmem:[#allocation7 + $0x38] sm:$0xf]
        %v1690 = vld [vmem:[#allocation7 + $0x3c] sm:$0xf]
        %v1691 = vld [vmem:[#allocation7 + $0x40] sm:$0xf]
        %v1692 = vld [vmem:[#allocation7 + $0x44] sm:$0xf]
        %v1693 = vld [vmem:[#allocation7 + $0x48] sm:$0xf]
        %v1694 = vld [vmem:[#allocation7 + $0x4c] sm:$0xf]
        %v1695 = vld [vmem:[#allocation7 + $0x50] sm:$0xf]
        %v1696 = vld [vmem:[#allocation7 + $0x54] sm:$0xf]
        %v1697 = vld [vmem:[#allocation7 + $0x58] sm:$0xf]
        %v1698 = vld [vmem:[#allocation7 + $0x5c] sm:$0xf]
        %v1699 = vpack.c.bf16 %v1671, %v1671
        %v1700 = vpack.c.bf16 %v1672, %v1672
        %v1709 = vunpack.c.l.b16 %v1683
        %v1710 = vunpack.c.l.b16 %v1684
        %v1711 = vunpack.c.l.b16 %v1685
        %v1712 = vunpack.c.l.b16 %v1686
        %v1713 = vunpack.c.l.b16 %v1687
        %v1714 = vunpack.c.l.b16 %v1688
        %v1715 = vunpack.c.l.b16 %v1689
        %v1716 = vunpack.c.l.b16 %v1690
        %v1717 = vpack.c.b16 %v1710, %v1709
        %v1718 = vpack.c.b16 %v1712, %v1711
        %v1719 = vpack.c.b16 %v1714, %v1713
        %v1720 = vpack.c.b16 %v1716, %v1715
        %v1726 = vsel %vm1626, %v1700, 0
        %1728 = vmatprep.subr.bf16.mxu0 0
        %1729 = vmatpush1.bf16.msra.mxu0 0
        %1730 = vmatprep.subr.bf16.mxu0 0
        %1731 = vmatpush1.bf16.msra.mxu0 0
        %1732 = vmatprep.subr.bf16.mxu0 0
        %1733 = vmatpush1.bf16.msra.mxu0 0
        %1734 = vmatprep.subr.bf16.mxu0 0
        %1735 = vmatpush1.bf16.msra.mxu0 0
        %1736 = vmatprep.subr.bf16.mxu0 0
        %1737 = vmatpush1.bf16.msra.mxu0 %v1720
        %1738 = vmatprep.subr.bf16.mxu0 0
        %1739 = vmatpush1.bf16.msra.mxu0 %v1719
        %1740 = vmatprep.subr.bf16.mxu0 0
        %1741 = vmatpush1.bf16.msra.mxu0 %v1718
        %1742 = vmatprep.subr.bf16.mxu0 0
        %1743 = vmatpush1.bf16.msra.mxu0 %v1717
        %1744 = vmatprep.subr.bf16.mxu0 0
        %1745 = vmatpush2.bf16.msra.mxu0 0
        %1746 = vmatprep.subr.bf16.mxu0 0
        %1747 = vmatpush2.bf16.msra.mxu0 0
        %1748 = vmatprep.subr.bf16.mxu0 0
        %1749 = vmatpush2.bf16.msra.mxu0 0
        %1750 = vmatprep.subr.bf16.mxu0 0
        %1751 = vmatpush2.bf16.msra.mxu0 0
        %1752 = vmatprep.subr.bf16.mxu0 0
        %1753 = vmatpush2.bf16.msra.mxu0 0
        %1754 = vmatprep.subr.bf16.mxu0 0
        %1755 = vmatpush2.bf16.msra.mxu0 0
        %1756 = vmatprep.subr.bf16.mxu0 0
        %1757 = vmatpush2.bf16.msra.mxu0 0
        %1758 = vmatprep.subr.bf16.mxu0 0
        %1759 = vmatpush2.bf16.msra.mxu0 0
        %1760 = vmatprep.mubr.bf16.mxu0 0
        %1761 = vmatmul.mubr.bf16.gmra.mxu0 %v1726
        %v1762 = vpop.f32.mrf.mxu0
        %v1763 = vadd.f32 0.0, %v1762
        %v1764 = vpop.f32.mrf.mxu0
        %v1765 = vpop.f32.mrf.mxu0
        %v1766 = vpop.f32.mrf.mxu0
        %1767 = vdwg.mxu0
        %v1776 = vunpack.c.l.b16 %v1675
        %v1777 = vunpack.c.l.b16 %v1676
        %v1778 = vunpack.c.l.b16 %v1677
        %v1779 = vunpack.c.l.b16 %v1678
        %v1780 = vunpack.c.l.b16 %v1679
        %v1781 = vunpack.c.l.b16 %v1680
        %v1782 = vunpack.c.l.b16 %v1681
        %v1783 = vunpack.c.l.b16 %v1682
        %v1784 = vpack.c.b16 %v1777, %v1776
        %v1785 = vpack.c.b16 %v1779, %v1778
        %v1786 = vpack.c.b16 %v1781, %v1780
        %v1787 = vpack.c.b16 %v1783, %v1782
        %v1793 = vsel %vm1626, %v1699, 0
        %1795 = vmatprep.subr.bf16.mxu0 0
        %1796 = vmatpush1.bf16.msra.mxu0 0
        %1797 = vmatprep.subr.bf16.mxu0 0
        %1798 = vmatpush1.bf16.msra.mxu0 0
        %1799 = vmatprep.subr.bf16.mxu0 0
        %1800 = vmatpush1.bf16.msra.mxu0 0
        %1801 = vmatprep.subr.bf16.mxu0 0
        %1802 = vmatpush1.bf16.msra.mxu0 0
        %1803 = vmatprep.subr.bf16.mxu0 0
        %1804 = vmatpush1.bf16.msra.mxu0 %v1787
        %1805 = vmatprep.subr.bf16.mxu0 0
        %1806 = vmatpush1.bf16.msra.mxu0 %v1786
        %1807 = vmatprep.subr.bf16.mxu0 0
        %1808 = vmatpush1.bf16.msra.mxu0 %v1785
        %1809 = vmatprep.subr.bf16.mxu0 0
        %1810 = vmatpush1.bf16.msra.mxu0 %v1784
        %1811 = vmatprep.subr.bf16.mxu0 0
        %1812 = vmatpush2.bf16.msra.mxu0 0
        %1813 = vmatprep.subr.bf16.mxu0 0
        %1814 = vmatpush2.bf16.msra.mxu0 0
        %1815 = vmatprep.subr.bf16.mxu0 0
        %1816 = vmatpush2.bf16.msra.mxu0 0
        %1817 = vmatprep.subr.bf16.mxu0 0
        %1818 = vmatpush2.bf16.msra.mxu0 0
        %1819 = vmatprep.subr.bf16.mxu0 0
        %1820 = vmatpush2.bf16.msra.mxu0 0
        %1821 = vmatprep.subr.bf16.mxu0 0
        %1822 = vmatpush2.bf16.msra.mxu0 0
        %1823 = vmatprep.subr.bf16.mxu0 0
        %1824 = vmatpush2.bf16.msra.mxu0 0
        %1825 = vmatprep.subr.bf16.mxu0 0
        %1826 = vmatpush2.bf16.msra.mxu0 0
        %1827 = vmatprep.mubr.bf16.mxu0 0
        %1828 = vmatmul.mubr.bf16.gmra.mxu0 %v1793
        %v1829 = vpop.f32.mrf.mxu0
        %v1830 = vadd.f32 %v1763, %v1829
        %v1831 = vpop.f32.mrf.mxu0
        %v1832 = vpop.f32.mrf.mxu0
        %v1833 = vpop.f32.mrf.mxu0
        %1834 = vdwg.mxu0
        %v1835 = vpack.c.bf16 %v1674, %v1674
        %v1844 = vunpack.c.l.b16 %v1691
        %v1845 = vunpack.c.l.b16 %v1692
        %v1846 = vunpack.c.l.b16 %v1693
        %v1847 = vunpack.c.l.b16 %v1694
        %v1848 = vunpack.c.l.b16 %v1695
        %v1849 = vunpack.c.l.b16 %v1696
        %v1850 = vunpack.c.l.b16 %v1697
        %v1851 = vunpack.c.l.b16 %v1698
        %v1852 = vpack.c.b16 %v1845, %v1844
        %v1853 = vpack.c.b16 %v1847, %v1846
        %v1854 = vpack.c.b16 %v1849, %v1848
        %v1855 = vpack.c.b16 %v1851, %v1850
        %v1861 = vsel %vm1626, %v1835, 0
        %1863 = vmatprep.subr.bf16.mxu0 0
        %1864 = vmatpush1.bf16.msra.mxu0 0
        %1865 = vmatprep.subr.bf16.mxu0 0
        %1866 = vmatpush1.bf16.msra.mxu0 0
        %1867 = vmatprep.subr.bf16.mxu0 0
        %1868 = vmatpush1.bf16.msra.mxu0 0
        %1869 = vmatprep.subr.bf16.mxu0 0
        %1870 = vmatpush1.bf16.msra.mxu0 0
        %1871 = vmatprep.subr.bf16.mxu0 0
        %1872 = vmatpush1.bf16.msra.mxu0 %v1855
        %1873 = vmatprep.subr.bf16.mxu0 0
        %1874 = vmatpush1.bf16.msra.mxu0 %v1854
        %1875 = vmatprep.subr.bf16.mxu0 0
        %1876 = vmatpush1.bf16.msra.mxu0 %v1853
        %1877 = vmatprep.subr.bf16.mxu0 0
        %1878 = vmatpush1.bf16.msra.mxu0 %v1852
        %1879 = vmatprep.subr.bf16.mxu0 0
        %1880 = vmatpush2.bf16.msra.mxu0 0
        %1881 = vmatprep.subr.bf16.mxu0 0
        %1882 = vmatpush2.bf16.msra.mxu0 0
        %1883 = vmatprep.subr.bf16.mxu0 0
        %1884 = vmatpush2.bf16.msra.mxu0 0
        %1885 = vmatprep.subr.bf16.mxu0 0
        %1886 = vmatpush2.bf16.msra.mxu0 0
        %1887 = vmatprep.subr.bf16.mxu0 0
        %1888 = vmatpush2.bf16.msra.mxu0 0
        %1889 = vmatprep.subr.bf16.mxu0 0
        %1890 = vmatpush2.bf16.msra.mxu0 0
        %1891 = vmatprep.subr.bf16.mxu0 0
        %1892 = vmatpush2.bf16.msra.mxu0 0
        %1893 = vmatprep.subr.bf16.mxu0 0
        %1894 = vmatpush2.bf16.msra.mxu0 0
        %1895 = vmatprep.mubr.bf16.mxu0 0
        %1896 = vmatmul.mubr.bf16.gmra.mxu0 %v1861
        %v1897 = vpop.f32.mrf.mxu0
        %v1898 = vadd.f32 0.0, %v1897
        %v1899 = vpop.f32.mrf.mxu0
        %v1900 = vpop.f32.mrf.mxu0
        %v1901 = vpop.f32.mrf.mxu0
        %1902 = vdwg.mxu0
        %v1903 = vadd.f32 %v1830, %v1898
        %v1904 = vld [vmem:[%s9] sm:$0x1]
        %v1906 = vlaneseq
        %v1907 = vshrl.u32 %v1906, 7
        %v1908 = vsub.s32 0, %v1907
        %v1909 = vrot.slane %v1904, %v1908
        %v1911 = vadd.f32 %v1903, %v1909
        %1912 = vst [vmem:[%s419] sm:$0xff] %v1911
        %s1913 = sand.u32 %s256, 1
        %s1914 = scalar_lea.sflag [#allocation4], %s1913
        %s1915 = sand.u32 %s256, 1
        %s1916 = smul.addr %s1915, 8
        %s1917 = scalar_lea.vmem [#allocation8], %s1916
        // Predicated region
        $region73: #{tpu_custom_call.1} parent=59 // pred_check
          %p1918 = pneg %p266
        $region74: #{tpu_custom_call.1} parent=59 // pred_check_branch
          %1920 = sbr.rel (%p1918) target = $region76
        $region75: #{tpu_custom_call.1} parent=59 // pred_region
          %s1922 = ssub.s32 128, 128
          %1923 = vsyncadd %s1914, %s1922
          %s1924 = smul.addr %s28, 128
          %s1925 = scalar_lea.hbm %s10, %s1924
          %s1927 = sshll.u32 %s1917, 4
          %s1928 = int_to_ptr.vmem [resolvable:$true] %s1927
          %1930 = dma.vmem_to_hbm [thread:$0]  %s1928, 128, %s1925, %s1914
        $region76: #{tpu_custom_call.1} parent=59 // pred_fallthru
          _
      $region60: #{tpu_custom_call.1} parent=5 // pred_fallthru
        _
      %p1931 = scmp.le.s32.totalorder 2, %s23
      // Predicated region
      $region77: #{tpu_custom_call.1} parent=5 // pred_check
        %p1932 = pneg %p1931
      $region78: #{tpu_custom_call.1} parent=5 // pred_check_branch
        %1934 = sbr.rel (%p1932) target = $region80
      $region79: #{tpu_custom_call.1} parent=5 // pred_region
        %s1935 = ssub.s32 %s23, 2
        // Predicated region
        $region81: #{tpu_custom_call.1} parent=79 // pred_check
          %p1936 = pneg %p272
        $region82: #{tpu_custom_call.1} parent=79 // pred_check_branch
          %1938 = sbr.rel (%p1936) target = $region84
        $region83: #{tpu_custom_call.1} parent=79 // pred_region
          %s1939 = sand.u32 %s257, 1
          %s1940 = scalar_lea.sflag [#allocation4], %s1939
          %s1941 = sand.u32 %s257, 1
          %s1942 = smul.addr %s1941, 8
          %s1943 = scalar_lea.vmem [#allocation8], %s1942
          %1944 = dma.done %s1940, 128
        $region84: #{tpu_custom_call.1} parent=79 // pred_fallthru
          _
      $region80: #{tpu_custom_call.1} parent=5 // pred_fallthru
        _
    $region6: #{tpu_custom_call.1} parent=1 // loop_footer
      %s27 = sadd.s32 1, %s23
    $region7: #{tpu_custom_call.1} parent=1 // loop_footer_branch
      %22 = sbr.rel target = $region3
    $region8: #{tpu_custom_call.1} parent=1 // loop_exit
      _
    %1945 = vsyncpa [#allocation3], 1
    %s1946 = scalar_lea.sflag [#allocation3], 1
    %1947 = vsyncpa %s1946, 1
    %1948 = vsyncpa [#allocation6], 1
    %1949 = vsyncpa [#allocation4], 1
    %s1950 = scalar_lea.sflag [#allocation4], 1
    %1951 = vsyncpa %s1950, 1

</llo_original>
